<compile_context>
chip_gen: v7x
topology: tpu7x:2x2x1
jax: 0.10.0
libtpu: 0.0.40
codegen_flags: <defaults>
</compile_context>

<pallas_src>
import functools

import jax
import jax.numpy as jnp
from jax.experimental import pallas as pl
from jax.experimental.pallas import tpu as pltpu

# ---- "opt" configuration (small synthetic sizes) ----
LAYERS = 2
WORD_VEC_SIZE = 32      # == opt.word_vec_size
TOPIC_VEC_SIZE = 32     # == opt.topic_vec_size (must equal word_vec_size for the add)
TOPIC_NUM = 16          # == opt.topic_num
VOCAB = 50
SEQ_LEN = 8
BATCH = 2
PAD = 0                 # onmt.Constants.PAD


def encoder_mean_kernel(tok_ref, lut_hbm, w_ref, b_ref, tmat_ref,
                        out_ref, emb_vmem, sem, *, L, B):
    # tok_ref : (L*B,) int32 token ids in SMEM (scalar prefetch), length-major
    # lut_hbm : (V, D) embedding table, resident in HBM (PAD row is zero)
    # w_ref   : (T, D) nn.Linear weight layout (VMEM)
    # b_ref   : (1, T) bias (VMEM)
    # tmat_ref: (D, T) topic_matrix (VMEM)
    # out_ref : ((L+2)*B, D) packed output slab:
    #             rows [0, L*B)          emb + topic_vec (memory bank, row = l*B+b)
    #             rows [L*B, L*B+B)      mean over length
    #             rows [L*B+B, (L+2)*B)  topic_vec
    # emb_vmem: (L*B, D) VMEM scratch holding the gathered embedding rows
    # sem     : (L*B,) DMA semaphores
    N = L * B

    # ---- fused embedding gather: one small DMA per token row, all in flight ----
    for i in range(N):                      # static unroll, N == 16 here
        pltpu.make_async_copy(
            lut_hbm.at[pl.ds(tok_ref[i], 1), :],
            emb_vmem.at[pl.ds(i, 1), :],
            sem.at[i],
        ).start()
    for i in range(N):
        pltpu.make_async_copy(
            lut_hbm.at[pl.ds(0, 1), :],      # shape-only descriptor for the wait
            emb_vmem.at[pl.ds(i, 1), :],
            sem.at[i],
        ).wait()

    emb = emb_vmem[...]                                          # (L*B, D) f32

    # Per-batch sum over length: rows l*B .. (l+1)*B-1 hold position l for all batches.
    esum = emb[0:B, :]
    for l in range(1, L):
        esum = esum + emb[l * B:(l + 1) * B, :]                  # (B, D)

    # Topic weights: sum_L(emb @ W^T + b) == esum @ W^T + L*b.
    # Done on the VPU/XLU (broadcast-mul + lane reduce) -- MXU would be <1% full.
    s = jnp.sum(esum[:, None, :] * w_ref[...][None, :, :], axis=-1)   # (B, T)
    s = s + jnp.float32(L) * b_ref[...]

    # softmax over topics (nn.Softmax() on 2D -> dim 1); reciprocal on the EUP.
    m = jnp.max(s, axis=-1, keepdims=True)
    e = jnp.exp(s - m)
    dist = e * pl.reciprocal(jnp.sum(e, axis=-1, keepdims=True), approx=True)

    # topic_vec = bmm(topic_matrix.expand(B,D,T), dist.unsqueeze(2)).squeeze(2)
    #           = contract dist with topic_matrix over the topic axis.
    tvec = jnp.sum(tmat_ref[...][None, :, :] * dist[:, None, :], axis=-1)  # (B, D)

    # mean over length of (emb + tvec) == esum/L + tvec (reuses the same sum).
    mean = esum * jnp.float32(1.0 / L) + tvec                    # (B, D)

    # Single contiguous store of the packed slab.
    out_ref[...] = jnp.concatenate(
        [emb + jnp.tile(tvec, (L, 1)), mean, tvec], axis=0)      # ((L+2)*B, D)


def encoder_forward(tokens, word_lut, lin_w, lin_b, topic_matrix, layers=LAYERS):
    """tokens: (L, B, 1) int. Returns ((h, h), outputs, topic_vec)."""
    L, B, _ = tokens.shape
    V, D = word_lut.shape
    T, Dw = lin_w.shape
    assert topic_matrix.shape == (D, T)
    assert Dw == D, "emb + topic_vec requires topic_vec_size == word_vec_size"

    # Flat, length-major token ids (row i of the gathered emb = (l, b) = divmod(i, B)).
    tok_flat = tokens[:, :, 0].reshape(-1).astype(jnp.int32)     # (L*B,)

    kernel = functools.partial(encoder_mean_kernel, L=L, B=B)

    out = pl.pallas_call(
        kernel,
        out_shape=jax.ShapeDtypeStruct(((L + 2) * B, D), jnp.float32),
        grid_spec=pltpu.PrefetchScalarGridSpec(
            num_scalar_prefetch=1,                               # token ids -> SMEM
            grid=(1,),
            in_specs=[
                pl.BlockSpec(memory_space=pl.ANY),               # word_lut stays in HBM
                pl.BlockSpec((T, D), lambda i, tok: (0, 0)),     # lin_w
                pl.BlockSpec((1, T), lambda i, tok: (0, 0)),     # lin_b
                pl.BlockSpec((D, T), lambda i, tok: (0, 0)),     # topic_matrix
            ],
            out_specs=pl.BlockSpec(((L + 2) * B, D), lambda i, tok: (0, 0)),
            scratch_shapes=[
                pltpu.VMEM((L * B, D), jnp.float32),             # gathered embeddings
                pltpu.SemaphoreType.DMA((L * B,)),               # one sem per row DMA
            ],
        ),
        compiler_params=pltpu.CompilerParams(
            dimension_semantics=("arbitrary",)),
    )(tok_flat, word_lut, lin_w, lin_b.reshape(1, -1), topic_matrix)

    emb_out = out[:L * B].reshape(L, B, D)                       # memory bank
    mean = out[L * B:L * B + B]                                  # (B, D)
    tvec = out[L * B + B:]                                       # (B, D)

    hidden = jnp.broadcast_to(mean, (layers, B, D))              # mean.expand(layers,B,D)
    topic_vec = tvec[:, :, None]                                 # (B, D, 1) like torch bmm
    return (hidden, hidden), emb_out, topic_vec


def _reference(tokens, word_lut, lin_w, lin_b, topic_matrix):
    """Pure-JAX reference of the same forward (for a sanity check)."""
    emb = jnp.take(word_lut, tokens[:, :, 0], axis=0).astype(jnp.float32)
    tw = jnp.einsum('lbd,td->lbt', emb, lin_w) + lin_b[None, None, :]
    s = tw.sum(0)
    dist = jax.nn.softmax(s, axis=-1)
    tvec = dist @ topic_matrix.T
    emb_out = emb + tvec[None, :, :]
    mean = emb_out.mean(0)
    hidden = jnp.broadcast_to(mean, (LAYERS,) + mean.shape)
    return (hidden, hidden), emb_out, tvec[:, :, None]


if __name__ == "__main__":
    key = jax.random.PRNGKey(0)
    k_tok, k_lut, k_w, k_b, k_tm = jax.random.split(key, 5)

    # LongTensor len x batch x nfeat (nfeat = 1, word ids only)
    tokens = jax.random.randint(k_tok, (SEQ_LEN, BATCH, 1), 1, VOCAB, dtype=jnp.int32)

    # Embedding table with padding_idx row zeroed (onmt.Constants.PAD == 0).
    # NOTE: padding_idx semantics rely on this caller-side zeroing, as in nn.Embedding.
    word_lut = jax.random.normal(k_lut, (VOCAB, WORD_VEC_SIZE), jnp.float32) * 0.1
    word_lut = word_lut.at[PAD].set(0.0)

    # Topic2Vec BottleLinear(topic_vec_size -> topic_num)
    lin_w = jax.random.uniform(k_w, (TOPIC_NUM, TOPIC_VEC_SIZE), jnp.float32, -0.1, 0.1)
    lin_b = jax.random.uniform(k_b, (TOPIC_NUM,), jnp.float32, -0.1, 0.1)

    # topic_matrix: topic_vec_size x topic_num, uniform(-0.01, 0.01)
    topic_matrix = jax.random.uniform(
        k_tm, (TOPIC_VEC_SIZE, TOPIC_NUM), jnp.float32, -0.01, 0.01)

    (h0, h1), outputs, topic_vec = jax.block_until_ready(
        encoder_forward(tokens, word_lut, lin_w, lin_b, topic_matrix))

    # loose sanity check against a pure-JAX reference (approx reciprocal / reassociation)
    (rh0, _), routs, rtvec = _reference(tokens, word_lut, lin_w, lin_b, topic_matrix)
    assert jnp.allclose(outputs, routs, rtol=1e-2, atol=1e-2)
    assert jnp.allclose(h0, rh0, rtol=1e-2, atol=1e-2)
    assert jnp.allclose(topic_vec, rtvec, rtol=1e-2, atol=1e-2)

    assert h0.shape == (LAYERS, BATCH, WORD_VEC_SIZE)
    assert outputs.shape == (SEQ_LEN, BATCH, WORD_VEC_SIZE)
    assert topic_vec.shape == (BATCH, TOPIC_VEC_SIZE, 1)
    print("KERNEL_OK")
</pallas_src>

<mosaic_0001>
module attributes {stable_mosaic.version = 11 : i64} {
  func.func @encoder_mean_kernel(%arg0: i32, %arg1: memref<16xi32, #tpu.memory_space<smem>>, %arg2: memref<50x32xf32, #tpu.memory_space<any>>, %arg3: memref<16x32xf32, #tpu.memory_space<vmem>>, %arg4: memref<1x16xf32, #tpu.memory_space<vmem>>, %arg5: memref<32x16xf32, #tpu.memory_space<vmem>>, %arg6: memref<20x32xf32, #tpu.memory_space<vmem>>, %arg7: memref<16x32xf32, #tpu.memory_space<vmem>>, %arg8: memref<16x!tpu.dma_semaphore, #tpu.memory_space<semaphore_mem>>) attributes {dimension_semantics = [#tpu.dimension_semantics<arbitrary>], iteration_bounds = array<i64: 1>, scalar_prefetch = 1 : i64, scratch_operands = 2 : i64, tpu.core_type = #tpu.core_type<tc>, window_params = [{}, {pipeline_mode = #tpu.pipeline_mode<synchronous>, transform_indices = @transform_1, window_bounds = array<i64: 16, 32>}, {pipeline_mode = #tpu.pipeline_mode<synchronous>, transform_indices = @transform_2, window_bounds = array<i64: 1, 16>}, {pipeline_mode = #tpu.pipeline_mode<synchronous>, transform_indices = @transform_3, window_bounds = array<i64: 32, 16>}, {pipeline_mode = #tpu.pipeline_mode<synchronous>, transform_indices = @transform_4, window_bounds = array<i64: 20, 32>}]} {
    %c0 = arith.constant 0 : index
    %0 = memref.load %arg1[%c0] : memref<16xi32, #tpu.memory_space<smem>>
    %c0_i32 = arith.constant 0 : i32
    %c0_i32_0 = arith.constant 0 : i32
    %1 = tpu.memref_slice %arg2[%0, %c0_i32_0] : memref<50x32xf32, #tpu.memory_space<any>> -> memref<1x32xf32, #tpu.memory_space<any>>
    %c0_i32_1 = arith.constant 0 : i32
    %c0_i32_2 = arith.constant 0 : i32
    %2 = tpu.memref_slice %arg7[%c0_i32_1, %c0_i32_2] : memref<16x32xf32, #tpu.memory_space<vmem>> -> memref<1x32xf32, #tpu.memory_space<vmem>>
    %3 = tpu.memref_slice %arg8[%c0_i32] : memref<16x!tpu.dma_semaphore, #tpu.memory_space<semaphore_mem>> -> memref<1x!tpu.dma_semaphore, #tpu.memory_space<semaphore_mem>>
    %4 = tpu.memref_squeeze %3 : memref<1x!tpu.dma_semaphore, #tpu.memory_space<semaphore_mem>> -> memref<!tpu.dma_semaphore, #tpu.memory_space<semaphore_mem>>
    tpu.enqueue_dma source(%1 : memref<1x32xf32, #tpu.memory_space<any>>) target(%2 : memref<1x32xf32, #tpu.memory_space<vmem>>) target_semaphore(%4 : memref<!tpu.dma_semaphore, #tpu.memory_space<semaphore_mem>>)
    %c1 = arith.constant 1 : index
    %5 = memref.load %arg1[%c1] : memref<16xi32, #tpu.memory_space<smem>>
    %c1_i32 = arith.constant 1 : i32
    %c0_i32_3 = arith.constant 0 : i32
    %6 = tpu.memref_slice %arg2[%5, %c0_i32_3] : memref<50x32xf32, #tpu.memory_space<any>> -> memref<1x32xf32, #tpu.memory_space<any>>
    %c1_i32_4 = arith.constant 1 : i32
    %c0_i32_5 = arith.constant 0 : i32
    %7 = tpu.memref_slice %arg7[%c1_i32_4, %c0_i32_5] : memref<16x32xf32, #tpu.memory_space<vmem>> -> memref<1x32xf32, #tpu.memory_space<vmem>>
    %8 = tpu.memref_slice %arg8[%c1_i32] : memref<16x!tpu.dma_semaphore, #tpu.memory_space<semaphore_mem>> -> memref<1x!tpu.dma_semaphore, #tpu.memory_space<semaphore_mem>>
    %9 = tpu.memref_squeeze %8 : memref<1x!tpu.dma_semaphore, #tpu.memory_space<semaphore_mem>> -> memref<!tpu.dma_semaphore, #tpu.memory_space<semaphore_mem>>
    tpu.enqueue_dma source(%6 : memref<1x32xf32, #tpu.memory_space<any>>) target(%7 : memref<1x32xf32, #tpu.memory_space<vmem>>) target_semaphore(%9 : memref<!tpu.dma_semaphore, #tpu.memory_space<semaphore_mem>>)
    %c2 = arith.constant 2 : index
    %10 = memref.load %arg1[%c2] : memref<16xi32, #tpu.memory_space<smem>>
    %c2_i32 = arith.constant 2 : i32
    %c0_i32_6 = arith.constant 0 : i32
    %11 = tpu.memref_slice %arg2[%10, %c0_i32_6] : memref<50x32xf32, #tpu.memory_space<any>> -> memref<1x32xf32, #tpu.memory_space<any>>
    %c2_i32_7 = arith.constant 2 : i32
    %c0_i32_8 = arith.constant 0 : i32
    %12 = tpu.memref_slice %arg7[%c2_i32_7, %c0_i32_8] : memref<16x32xf32, #tpu.memory_space<vmem>> -> memref<1x32xf32, #tpu.memory_space<vmem>>
    %13 = tpu.memref_slice %arg8[%c2_i32] : memref<16x!tpu.dma_semaphore, #tpu.memory_space<semaphore_mem>> -> memref<1x!tpu.dma_semaphore, #tpu.memory_space<semaphore_mem>>
    %14 = tpu.memref_squeeze %13 : memref<1x!tpu.dma_semaphore, #tpu.memory_space<semaphore_mem>> -> memref<!tpu.dma_semaphore, #tpu.memory_space<semaphore_mem>>
    tpu.enqueue_dma source(%11 : memref<1x32xf32, #tpu.memory_space<any>>) target(%12 : memref<1x32xf32, #tpu.memory_space<vmem>>) target_semaphore(%14 : memref<!tpu.dma_semaphore, #tpu.memory_space<semaphore_mem>>)
    %c3 = arith.constant 3 : index
    %15 = memref.load %arg1[%c3] : memref<16xi32, #tpu.memory_space<smem>>
    %c3_i32 = arith.constant 3 : i32
    %c0_i32_9 = arith.constant 0 : i32
    %16 = tpu.memref_slice %arg2[%15, %c0_i32_9] : memref<50x32xf32, #tpu.memory_space<any>> -> memref<1x32xf32, #tpu.memory_space<any>>
    %c3_i32_10 = arith.constant 3 : i32
    %c0_i32_11 = arith.constant 0 : i32
    %17 = tpu.memref_slice %arg7[%c3_i32_10, %c0_i32_11] : memref<16x32xf32, #tpu.memory_space<vmem>> -> memref<1x32xf32, #tpu.memory_space<vmem>>
    %18 = tpu.memref_slice %arg8[%c3_i32] : memref<16x!tpu.dma_semaphore, #tpu.memory_space<semaphore_mem>> -> memref<1x!tpu.dma_semaphore, #tpu.memory_space<semaphore_mem>>
    %19 = tpu.memref_squeeze %18 : memref<1x!tpu.dma_semaphore, #tpu.memory_space<semaphore_mem>> -> memref<!tpu.dma_semaphore, #tpu.memory_space<semaphore_mem>>
    tpu.enqueue_dma source(%16 : memref<1x32xf32, #tpu.memory_space<any>>) target(%17 : memref<1x32xf32, #tpu.memory_space<vmem>>) target_semaphore(%19 : memref<!tpu.dma_semaphore, #tpu.memory_space<semaphore_mem>>)
    %c4 = arith.constant 4 : index
    %20 = memref.load %arg1[%c4] : memref<16xi32, #tpu.memory_space<smem>>
    %c4_i32 = arith.constant 4 : i32
    %c0_i32_12 = arith.constant 0 : i32
    %21 = tpu.memref_slice %arg2[%20, %c0_i32_12] : memref<50x32xf32, #tpu.memory_space<any>> -> memref<1x32xf32, #tpu.memory_space<any>>
    %c4_i32_13 = arith.constant 4 : i32
    %c0_i32_14 = arith.constant 0 : i32
    %22 = tpu.memref_slice %arg7[%c4_i32_13, %c0_i32_14] : memref<16x32xf32, #tpu.memory_space<vmem>> -> memref<1x32xf32, #tpu.memory_space<vmem>>
    %23 = tpu.memref_slice %arg8[%c4_i32] : memref<16x!tpu.dma_semaphore, #tpu.memory_space<semaphore_mem>> -> memref<1x!tpu.dma_semaphore, #tpu.memory_space<semaphore_mem>>
    %24 = tpu.memref_squeeze %23 : memref<1x!tpu.dma_semaphore, #tpu.memory_space<semaphore_mem>> -> memref<!tpu.dma_semaphore, #tpu.memory_space<semaphore_mem>>
    tpu.enqueue_dma source(%21 : memref<1x32xf32, #tpu.memory_space<any>>) target(%22 : memref<1x32xf32, #tpu.memory_space<vmem>>) target_semaphore(%24 : memref<!tpu.dma_semaphore, #tpu.memory_space<semaphore_mem>>)
    %c5 = arith.constant 5 : index
    %25 = memref.load %arg1[%c5] : memref<16xi32, #tpu.memory_space<smem>>
    %c5_i32 = arith.constant 5 : i32
    %c0_i32_15 = arith.constant 0 : i32
    %26 = tpu.memref_slice %arg2[%25, %c0_i32_15] : memref<50x32xf32, #tpu.memory_space<any>> -> memref<1x32xf32, #tpu.memory_space<any>>
    %c5_i32_16 = arith.constant 5 : i32
    %c0_i32_17 = arith.constant 0 : i32
    %27 = tpu.memref_slice %arg7[%c5_i32_16, %c0_i32_17] : memref<16x32xf32, #tpu.memory_space<vmem>> -> memref<1x32xf32, #tpu.memory_space<vmem>>
    %28 = tpu.memref_slice %arg8[%c5_i32] : memref<16x!tpu.dma_semaphore, #tpu.memory_space<semaphore_mem>> -> memref<1x!tpu.dma_semaphore, #tpu.memory_space<semaphore_mem>>
    %29 = tpu.memref_squeeze %28 : memref<1x!tpu.dma_semaphore, #tpu.memory_space<semaphore_mem>> -> memref<!tpu.dma_semaphore, #tpu.memory_space<semaphore_mem>>
    tpu.enqueue_dma source(%26 : memref<1x32xf32, #tpu.memory_space<any>>) target(%27 : memref<1x32xf32, #tpu.memory_space<vmem>>) target_semaphore(%29 : memref<!tpu.dma_semaphore, #tpu.memory_space<semaphore_mem>>)
    %c6 = arith.constant 6 : index
    %30 = memref.load %arg1[%c6] : memref<16xi32, #tpu.memory_space<smem>>
    %c6_i32 = arith.constant 6 : i32
    %c0_i32_18 = arith.constant 0 : i32
    %31 = tpu.memref_slice %arg2[%30, %c0_i32_18] : memref<50x32xf32, #tpu.memory_space<any>> -> memref<1x32xf32, #tpu.memory_space<any>>
    %c6_i32_19 = arith.constant 6 : i32
    %c0_i32_20 = arith.constant 0 : i32
    %32 = tpu.memref_slice %arg7[%c6_i32_19, %c0_i32_20] : memref<16x32xf32, #tpu.memory_space<vmem>> -> memref<1x32xf32, #tpu.memory_space<vmem>>
    %33 = tpu.memref_slice %arg8[%c6_i32] : memref<16x!tpu.dma_semaphore, #tpu.memory_space<semaphore_mem>> -> memref<1x!tpu.dma_semaphore, #tpu.memory_space<semaphore_mem>>
    %34 = tpu.memref_squeeze %33 : memref<1x!tpu.dma_semaphore, #tpu.memory_space<semaphore_mem>> -> memref<!tpu.dma_semaphore, #tpu.memory_space<semaphore_mem>>
    tpu.enqueue_dma source(%31 : memref<1x32xf32, #tpu.memory_space<any>>) target(%32 : memref<1x32xf32, #tpu.memory_space<vmem>>) target_semaphore(%34 : memref<!tpu.dma_semaphore, #tpu.memory_space<semaphore_mem>>)
    %c7 = arith.constant 7 : index
    %35 = memref.load %arg1[%c7] : memref<16xi32, #tpu.memory_space<smem>>
    %c7_i32 = arith.constant 7 : i32
    %c0_i32_21 = arith.constant 0 : i32
    %36 = tpu.memref_slice %arg2[%35, %c0_i32_21] : memref<50x32xf32, #tpu.memory_space<any>> -> memref<1x32xf32, #tpu.memory_space<any>>
    %c7_i32_22 = arith.constant 7 : i32
    %c0_i32_23 = arith.constant 0 : i32
    %37 = tpu.memref_slice %arg7[%c7_i32_22, %c0_i32_23] : memref<16x32xf32, #tpu.memory_space<vmem>> -> memref<1x32xf32, #tpu.memory_space<vmem>>
    %38 = tpu.memref_slice %arg8[%c7_i32] : memref<16x!tpu.dma_semaphore, #tpu.memory_space<semaphore_mem>> -> memref<1x!tpu.dma_semaphore, #tpu.memory_space<semaphore_mem>>
    %39 = tpu.memref_squeeze %38 : memref<1x!tpu.dma_semaphore, #tpu.memory_space<semaphore_mem>> -> memref<!tpu.dma_semaphore, #tpu.memory_space<semaphore_mem>>
    tpu.enqueue_dma source(%36 : memref<1x32xf32, #tpu.memory_space<any>>) target(%37 : memref<1x32xf32, #tpu.memory_space<vmem>>) target_semaphore(%39 : memref<!tpu.dma_semaphore, #tpu.memory_space<semaphore_mem>>)
    %c8 = arith.constant 8 : index
    %40 = memref.load %arg1[%c8] : memref<16xi32, #tpu.memory_space<smem>>
    %c8_i32 = arith.constant 8 : i32
    %c0_i32_24 = arith.constant 0 : i32
    %41 = tpu.memref_slice %arg2[%40, %c0_i32_24] : memref<50x32xf32, #tpu.memory_space<any>> -> memref<1x32xf32, #tpu.memory_space<any>>
    %c8_i32_25 = arith.constant 8 : i32
    %c0_i32_26 = arith.constant 0 : i32
    %42 = tpu.memref_slice %arg7[%c8_i32_25, %c0_i32_26] : memref<16x32xf32, #tpu.memory_space<vmem>> -> memref<1x32xf32, #tpu.memory_space<vmem>>
    %43 = tpu.memref_slice %arg8[%c8_i32] : memref<16x!tpu.dma_semaphore, #tpu.memory_space<semaphore_mem>> -> memref<1x!tpu.dma_semaphore, #tpu.memory_space<semaphore_mem>>
    %44 = tpu.memref_squeeze %43 : memref<1x!tpu.dma_semaphore, #tpu.memory_space<semaphore_mem>> -> memref<!tpu.dma_semaphore, #tpu.memory_space<semaphore_mem>>
    tpu.enqueue_dma source(%41 : memref<1x32xf32, #tpu.memory_space<any>>) target(%42 : memref<1x32xf32, #tpu.memory_space<vmem>>) target_semaphore(%44 : memref<!tpu.dma_semaphore, #tpu.memory_space<semaphore_mem>>)
    %c9 = arith.constant 9 : index
    %45 = memref.load %arg1[%c9] : memref<16xi32, #tpu.memory_space<smem>>
    %c9_i32 = arith.constant 9 : i32
    %c0_i32_27 = arith.constant 0 : i32
    %46 = tpu.memref_slice %arg2[%45, %c0_i32_27] : memref<50x32xf32, #tpu.memory_space<any>> -> memref<1x32xf32, #tpu.memory_space<any>>
    %c9_i32_28 = arith.constant 9 : i32
    %c0_i32_29 = arith.constant 0 : i32
    %47 = tpu.memref_slice %arg7[%c9_i32_28, %c0_i32_29] : memref<16x32xf32, #tpu.memory_space<vmem>> -> memref<1x32xf32, #tpu.memory_space<vmem>>
    %48 = tpu.memref_slice %arg8[%c9_i32] : memref<16x!tpu.dma_semaphore, #tpu.memory_space<semaphore_mem>> -> memref<1x!tpu.dma_semaphore, #tpu.memory_space<semaphore_mem>>
    %49 = tpu.memref_squeeze %48 : memref<1x!tpu.dma_semaphore, #tpu.memory_space<semaphore_mem>> -> memref<!tpu.dma_semaphore, #tpu.memory_space<semaphore_mem>>
    tpu.enqueue_dma source(%46 : memref<1x32xf32, #tpu.memory_space<any>>) target(%47 : memref<1x32xf32, #tpu.memory_space<vmem>>) target_semaphore(%49 : memref<!tpu.dma_semaphore, #tpu.memory_space<semaphore_mem>>)
    %c10 = arith.constant 10 : index
    %50 = memref.load %arg1[%c10] : memref<16xi32, #tpu.memory_space<smem>>
    %c10_i32 = arith.constant 10 : i32
    %c0_i32_30 = arith.constant 0 : i32
    %51 = tpu.memref_slice %arg2[%50, %c0_i32_30] : memref<50x32xf32, #tpu.memory_space<any>> -> memref<1x32xf32, #tpu.memory_space<any>>
    %c10_i32_31 = arith.constant 10 : i32
    %c0_i32_32 = arith.constant 0 : i32
    %52 = tpu.memref_slice %arg7[%c10_i32_31, %c0_i32_32] : memref<16x32xf32, #tpu.memory_space<vmem>> -> memref<1x32xf32, #tpu.memory_space<vmem>>
    %53 = tpu.memref_slice %arg8[%c10_i32] : memref<16x!tpu.dma_semaphore, #tpu.memory_space<semaphore_mem>> -> memref<1x!tpu.dma_semaphore, #tpu.memory_space<semaphore_mem>>
    %54 = tpu.memref_squeeze %53 : memref<1x!tpu.dma_semaphore, #tpu.memory_space<semaphore_mem>> -> memref<!tpu.dma_semaphore, #tpu.memory_space<semaphore_mem>>
    tpu.enqueue_dma source(%51 : memref<1x32xf32, #tpu.memory_space<any>>) target(%52 : memref<1x32xf32, #tpu.memory_space<vmem>>) target_semaphore(%54 : memref<!tpu.dma_semaphore, #tpu.memory_space<semaphore_mem>>)
    %c11 = arith.constant 11 : index
    %55 = memref.load %arg1[%c11] : memref<16xi32, #tpu.memory_space<smem>>
    %c11_i32 = arith.constant 11 : i32
    %c0_i32_33 = arith.constant 0 : i32
    %56 = tpu.memref_slice %arg2[%55, %c0_i32_33] : memref<50x32xf32, #tpu.memory_space<any>> -> memref<1x32xf32, #tpu.memory_space<any>>
    %c11_i32_34 = arith.constant 11 : i32
    %c0_i32_35 = arith.constant 0 : i32
    %57 = tpu.memref_slice %arg7[%c11_i32_34, %c0_i32_35] : memref<16x32xf32, #tpu.memory_space<vmem>> -> memref<1x32xf32, #tpu.memory_space<vmem>>
    %58 = tpu.memref_slice %arg8[%c11_i32] : memref<16x!tpu.dma_semaphore, #tpu.memory_space<semaphore_mem>> -> memref<1x!tpu.dma_semaphore, #tpu.memory_space<semaphore_mem>>
    %59 = tpu.memref_squeeze %58 : memref<1x!tpu.dma_semaphore, #tpu.memory_space<semaphore_mem>> -> memref<!tpu.dma_semaphore, #tpu.memory_space<semaphore_mem>>
    tpu.enqueue_dma source(%56 : memref<1x32xf32, #tpu.memory_space<any>>) target(%57 : memref<1x32xf32, #tpu.memory_space<vmem>>) target_semaphore(%59 : memref<!tpu.dma_semaphore, #tpu.memory_space<semaphore_mem>>)
    %c12 = arith.constant 12 : index
    %60 = memref.load %arg1[%c12] : memref<16xi32, #tpu.memory_space<smem>>
    %c12_i32 = arith.constant 12 : i32
    %c0_i32_36 = arith.constant 0 : i32
    %61 = tpu.memref_slice %arg2[%60, %c0_i32_36] : memref<50x32xf32, #tpu.memory_space<any>> -> memref<1x32xf32, #tpu.memory_space<any>>
    %c12_i32_37 = arith.constant 12 : i32
    %c0_i32_38 = arith.constant 0 : i32
    %62 = tpu.memref_slice %arg7[%c12_i32_37, %c0_i32_38] : memref<16x32xf32, #tpu.memory_space<vmem>> -> memref<1x32xf32, #tpu.memory_space<vmem>>
    %63 = tpu.memref_slice %arg8[%c12_i32] : memref<16x!tpu.dma_semaphore, #tpu.memory_space<semaphore_mem>> -> memref<1x!tpu.dma_semaphore, #tpu.memory_space<semaphore_mem>>
    %64 = tpu.memref_squeeze %63 : memref<1x!tpu.dma_semaphore, #tpu.memory_space<semaphore_mem>> -> memref<!tpu.dma_semaphore, #tpu.memory_space<semaphore_mem>>
    tpu.enqueue_dma source(%61 : memref<1x32xf32, #tpu.memory_space<any>>) target(%62 : memref<1x32xf32, #tpu.memory_space<vmem>>) target_semaphore(%64 : memref<!tpu.dma_semaphore, #tpu.memory_space<semaphore_mem>>)
    %c13 = arith.constant 13 : index
    %65 = memref.load %arg1[%c13] : memref<16xi32, #tpu.memory_space<smem>>
    %c13_i32 = arith.constant 13 : i32
    %c0_i32_39 = arith.constant 0 : i32
    %66 = tpu.memref_slice %arg2[%65, %c0_i32_39] : memref<50x32xf32, #tpu.memory_space<any>> -> memref<1x32xf32, #tpu.memory_space<any>>
    %c13_i32_40 = arith.constant 13 : i32
    %c0_i32_41 = arith.constant 0 : i32
    %67 = tpu.memref_slice %arg7[%c13_i32_40, %c0_i32_41] : memref<16x32xf32, #tpu.memory_space<vmem>> -> memref<1x32xf32, #tpu.memory_space<vmem>>
    %68 = tpu.memref_slice %arg8[%c13_i32] : memref<16x!tpu.dma_semaphore, #tpu.memory_space<semaphore_mem>> -> memref<1x!tpu.dma_semaphore, #tpu.memory_space<semaphore_mem>>
    %69 = tpu.memref_squeeze %68 : memref<1x!tpu.dma_semaphore, #tpu.memory_space<semaphore_mem>> -> memref<!tpu.dma_semaphore, #tpu.memory_space<semaphore_mem>>
    tpu.enqueue_dma source(%66 : memref<1x32xf32, #tpu.memory_space<any>>) target(%67 : memref<1x32xf32, #tpu.memory_space<vmem>>) target_semaphore(%69 : memref<!tpu.dma_semaphore, #tpu.memory_space<semaphore_mem>>)
    %c14 = arith.constant 14 : index
    %70 = memref.load %arg1[%c14] : memref<16xi32, #tpu.memory_space<smem>>
    %c14_i32 = arith.constant 14 : i32
    %c0_i32_42 = arith.constant 0 : i32
    %71 = tpu.memref_slice %arg2[%70, %c0_i32_42] : memref<50x32xf32, #tpu.memory_space<any>> -> memref<1x32xf32, #tpu.memory_space<any>>
    %c14_i32_43 = arith.constant 14 : i32
    %c0_i32_44 = arith.constant 0 : i32
    %72 = tpu.memref_slice %arg7[%c14_i32_43, %c0_i32_44] : memref<16x32xf32, #tpu.memory_space<vmem>> -> memref<1x32xf32, #tpu.memory_space<vmem>>
    %73 = tpu.memref_slice %arg8[%c14_i32] : memref<16x!tpu.dma_semaphore, #tpu.memory_space<semaphore_mem>> -> memref<1x!tpu.dma_semaphore, #tpu.memory_space<semaphore_mem>>
    %74 = tpu.memref_squeeze %73 : memref<1x!tpu.dma_semaphore, #tpu.memory_space<semaphore_mem>> -> memref<!tpu.dma_semaphore, #tpu.memory_space<semaphore_mem>>
    tpu.enqueue_dma source(%71 : memref<1x32xf32, #tpu.memory_space<any>>) target(%72 : memref<1x32xf32, #tpu.memory_space<vmem>>) target_semaphore(%74 : memref<!tpu.dma_semaphore, #tpu.memory_space<semaphore_mem>>)
    %c15 = arith.constant 15 : index
    %75 = memref.load %arg1[%c15] : memref<16xi32, #tpu.memory_space<smem>>
    %c15_i32 = arith.constant 15 : i32
    %c0_i32_45 = arith.constant 0 : i32
    %76 = tpu.memref_slice %arg2[%75, %c0_i32_45] : memref<50x32xf32, #tpu.memory_space<any>> -> memref<1x32xf32, #tpu.memory_space<any>>
    %c15_i32_46 = arith.constant 15 : i32
    %c0_i32_47 = arith.constant 0 : i32
    %77 = tpu.memref_slice %arg7[%c15_i32_46, %c0_i32_47] : memref<16x32xf32, #tpu.memory_space<vmem>> -> memref<1x32xf32, #tpu.memory_space<vmem>>
    %78 = tpu.memref_slice %arg8[%c15_i32] : memref<16x!tpu.dma_semaphore, #tpu.memory_space<semaphore_mem>> -> memref<1x!tpu.dma_semaphore, #tpu.memory_space<semaphore_mem>>
    %79 = tpu.memref_squeeze %78 : memref<1x!tpu.dma_semaphore, #tpu.memory_space<semaphore_mem>> -> memref<!tpu.dma_semaphore, #tpu.memory_space<semaphore_mem>>
    tpu.enqueue_dma source(%76 : memref<1x32xf32, #tpu.memory_space<any>>) target(%77 : memref<1x32xf32, #tpu.memory_space<vmem>>) target_semaphore(%79 : memref<!tpu.dma_semaphore, #tpu.memory_space<semaphore_mem>>)
    %c0_i32_48 = arith.constant 0 : i32
    %c0_i32_49 = arith.constant 0 : i32
    %c0_i32_50 = arith.constant 0 : i32
    %80 = tpu.memref_slice %arg2[%c0_i32_49, %c0_i32_50] : memref<50x32xf32, #tpu.memory_space<any>> -> memref<1x32xf32, #tpu.memory_space<any>>
    %c0_i32_51 = arith.constant 0 : i32
    %c0_i32_52 = arith.constant 0 : i32
    %81 = tpu.memref_slice %arg7[%c0_i32_51, %c0_i32_52] : memref<16x32xf32, #tpu.memory_space<vmem>> -> memref<1x32xf32, #tpu.memory_space<vmem>>
    %82 = tpu.memref_slice %arg8[%c0_i32_48] : memref<16x!tpu.dma_semaphore, #tpu.memory_space<semaphore_mem>> -> memref<1x!tpu.dma_semaphore, #tpu.memory_space<semaphore_mem>>
    %83 = tpu.memref_squeeze %82 : memref<1x!tpu.dma_semaphore, #tpu.memory_space<semaphore_mem>> -> memref<!tpu.dma_semaphore, #tpu.memory_space<semaphore_mem>>
    tpu.wait_dma2 semaphore(%83 : memref<!tpu.dma_semaphore, #tpu.memory_space<semaphore_mem>>) src(%80 : memref<1x32xf32, #tpu.memory_space<any>>) dst(%81 : memref<1x32xf32, #tpu.memory_space<vmem>>)
    %c1_i32_53 = arith.constant 1 : i32
    %c0_i32_54 = arith.constant 0 : i32
    %c0_i32_55 = arith.constant 0 : i32
    %84 = tpu.memref_slice %arg2[%c0_i32_54, %c0_i32_55] : memref<50x32xf32, #tpu.memory_space<any>> -> memref<1x32xf32, #tpu.memory_space<any>>
    %c1_i32_56 = arith.constant 1 : i32
    %c0_i32_57 = arith.constant 0 : i32
    %85 = tpu.memref_slice %arg7[%c1_i32_56, %c0_i32_57] : memref<16x32xf32, #tpu.memory_space<vmem>> -> memref<1x32xf32, #tpu.memory_space<vmem>>
    %86 = tpu.memref_slice %arg8[%c1_i32_53] : memref<16x!tpu.dma_semaphore, #tpu.memory_space<semaphore_mem>> -> memref<1x!tpu.dma_semaphore, #tpu.memory_space<semaphore_mem>>
    %87 = tpu.memref_squeeze %86 : memref<1x!tpu.dma_semaphore, #tpu.memory_space<semaphore_mem>> -> memref<!tpu.dma_semaphore, #tpu.memory_space<semaphore_mem>>
    tpu.wait_dma2 semaphore(%87 : memref<!tpu.dma_semaphore, #tpu.memory_space<semaphore_mem>>) src(%84 : memref<1x32xf32, #tpu.memory_space<any>>) dst(%85 : memref<1x32xf32, #tpu.memory_space<vmem>>)
    %c2_i32_58 = arith.constant 2 : i32
    %c0_i32_59 = arith.constant 0 : i32
    %c0_i32_60 = arith.constant 0 : i32
    %88 = tpu.memref_slice %arg2[%c0_i32_59, %c0_i32_60] : memref<50x32xf32, #tpu.memory_space<any>> -> memref<1x32xf32, #tpu.memory_space<any>>
    %c2_i32_61 = arith.constant 2 : i32
    %c0_i32_62 = arith.constant 0 : i32
    %89 = tpu.memref_slice %arg7[%c2_i32_61, %c0_i32_62] : memref<16x32xf32, #tpu.memory_space<vmem>> -> memref<1x32xf32, #tpu.memory_space<vmem>>
    %90 = tpu.memref_slice %arg8[%c2_i32_58] : memref<16x!tpu.dma_semaphore, #tpu.memory_space<semaphore_mem>> -> memref<1x!tpu.dma_semaphore, #tpu.memory_space<semaphore_mem>>
    %91 = tpu.memref_squeeze %90 : memref<1x!tpu.dma_semaphore, #tpu.memory_space<semaphore_mem>> -> memref<!tpu.dma_semaphore, #tpu.memory_space<semaphore_mem>>
    tpu.wait_dma2 semaphore(%91 : memref<!tpu.dma_semaphore, #tpu.memory_space<semaphore_mem>>) src(%88 : memref<1x32xf32, #tpu.memory_space<any>>) dst(%89 : memref<1x32xf32, #tpu.memory_space<vmem>>)
    %c3_i32_63 = arith.constant 3 : i32
    %c0_i32_64 = arith.constant 0 : i32
    %c0_i32_65 = arith.constant 0 : i32
    %92 = tpu.memref_slice %arg2[%c0_i32_64, %c0_i32_65] : memref<50x32xf32, #tpu.memory_space<any>> -> memref<1x32xf32, #tpu.memory_space<any>>
    %c3_i32_66 = arith.constant 3 : i32
    %c0_i32_67 = arith.constant 0 : i32
    %93 = tpu.memref_slice %arg7[%c3_i32_66, %c0_i32_67] : memref<16x32xf32, #tpu.memory_space<vmem>> -> memref<1x32xf32, #tpu.memory_space<vmem>>
    %94 = tpu.memref_slice %arg8[%c3_i32_63] : memref<16x!tpu.dma_semaphore, #tpu.memory_space<semaphore_mem>> -> memref<1x!tpu.dma_semaphore, #tpu.memory_space<semaphore_mem>>
    %95 = tpu.memref_squeeze %94 : memref<1x!tpu.dma_semaphore, #tpu.memory_space<semaphore_mem>> -> memref<!tpu.dma_semaphore, #tpu.memory_space<semaphore_mem>>
    tpu.wait_dma2 semaphore(%95 : memref<!tpu.dma_semaphore, #tpu.memory_space<semaphore_mem>>) src(%92 : memref<1x32xf32, #tpu.memory_space<any>>) dst(%93 : memref<1x32xf32, #tpu.memory_space<vmem>>)
    %c4_i32_68 = arith.constant 4 : i32
    %c0_i32_69 = arith.constant 0 : i32
    %c0_i32_70 = arith.constant 0 : i32
    %96 = tpu.memref_slice %arg2[%c0_i32_69, %c0_i32_70] : memref<50x32xf32, #tpu.memory_space<any>> -> memref<1x32xf32, #tpu.memory_space<any>>
    %c4_i32_71 = arith.constant 4 : i32
    %c0_i32_72 = arith.constant 0 : i32
    %97 = tpu.memref_slice %arg7[%c4_i32_71, %c0_i32_72] : memref<16x32xf32, #tpu.memory_space<vmem>> -> memref<1x32xf32, #tpu.memory_space<vmem>>
    %98 = tpu.memref_slice %arg8[%c4_i32_68] : memref<16x!tpu.dma_semaphore, #tpu.memory_space<semaphore_mem>> -> memref<1x!tpu.dma_semaphore, #tpu.memory_space<semaphore_mem>>
    %99 = tpu.memref_squeeze %98 : memref<1x!tpu.dma_semaphore, #tpu.memory_space<semaphore_mem>> -> memref<!tpu.dma_semaphore, #tpu.memory_space<semaphore_mem>>
    tpu.wait_dma2 semaphore(%99 : memref<!tpu.dma_semaphore, #tpu.memory_space<semaphore_mem>>) src(%96 : memref<1x32xf32, #tpu.memory_space<any>>) dst(%97 : memref<1x32xf32, #tpu.memory_space<vmem>>)
    %c5_i32_73 = arith.constant 5 : i32
    %c0_i32_74 = arith.constant 0 : i32
    %c0_i32_75 = arith.constant 0 : i32
    %100 = tpu.memref_slice %arg2[%c0_i32_74, %c0_i32_75] : memref<50x32xf32, #tpu.memory_space<any>> -> memref<1x32xf32, #tpu.memory_space<any>>
    %c5_i32_76 = arith.constant 5 : i32
    %c0_i32_77 = arith.constant 0 : i32
    %101 = tpu.memref_slice %arg7[%c5_i32_76, %c0_i32_77] : memref<16x32xf32, #tpu.memory_space<vmem>> -> memref<1x32xf32, #tpu.memory_space<vmem>>
    %102 = tpu.memref_slice %arg8[%c5_i32_73] : memref<16x!tpu.dma_semaphore, #tpu.memory_space<semaphore_mem>> -> memref<1x!tpu.dma_semaphore, #tpu.memory_space<semaphore_mem>>
    %103 = tpu.memref_squeeze %102 : memref<1x!tpu.dma_semaphore, #tpu.memory_space<semaphore_mem>> -> memref<!tpu.dma_semaphore, #tpu.memory_space<semaphore_mem>>
    tpu.wait_dma2 semaphore(%103 : memref<!tpu.dma_semaphore, #tpu.memory_space<semaphore_mem>>) src(%100 : memref<1x32xf32, #tpu.memory_space<any>>) dst(%101 : memref<1x32xf32, #tpu.memory_space<vmem>>)
    %c6_i32_78 = arith.constant 6 : i32
    %c0_i32_79 = arith.constant 0 : i32
    %c0_i32_80 = arith.constant 0 : i32
    %104 = tpu.memref_slice %arg2[%c0_i32_79, %c0_i32_80] : memref<50x32xf32, #tpu.memory_space<any>> -> memref<1x32xf32, #tpu.memory_space<any>>
    %c6_i32_81 = arith.constant 6 : i32
    %c0_i32_82 = arith.constant 0 : i32
    %105 = tpu.memref_slice %arg7[%c6_i32_81, %c0_i32_82] : memref<16x32xf32, #tpu.memory_space<vmem>> -> memref<1x32xf32, #tpu.memory_space<vmem>>
    %106 = tpu.memref_slice %arg8[%c6_i32_78] : memref<16x!tpu.dma_semaphore, #tpu.memory_space<semaphore_mem>> -> memref<1x!tpu.dma_semaphore, #tpu.memory_space<semaphore_mem>>
    %107 = tpu.memref_squeeze %106 : memref<1x!tpu.dma_semaphore, #tpu.memory_space<semaphore_mem>> -> memref<!tpu.dma_semaphore, #tpu.memory_space<semaphore_mem>>
    tpu.wait_dma2 semaphore(%107 : memref<!tpu.dma_semaphore, #tpu.memory_space<semaphore_mem>>) src(%104 : memref<1x32xf32, #tpu.memory_space<any>>) dst(%105 : memref<1x32xf32, #tpu.memory_space<vmem>>)
    %c7_i32_83 = arith.constant 7 : i32
    %c0_i32_84 = arith.constant 0 : i32
    %c0_i32_85 = arith.constant 0 : i32
    %108 = tpu.memref_slice %arg2[%c0_i32_84, %c0_i32_85] : memref<50x32xf32, #tpu.memory_space<any>> -> memref<1x32xf32, #tpu.memory_space<any>>
    %c7_i32_86 = arith.constant 7 : i32
    %c0_i32_87 = arith.constant 0 : i32
    %109 = tpu.memref_slice %arg7[%c7_i32_86, %c0_i32_87] : memref<16x32xf32, #tpu.memory_space<vmem>> -> memref<1x32xf32, #tpu.memory_space<vmem>>
    %110 = tpu.memref_slice %arg8[%c7_i32_83] : memref<16x!tpu.dma_semaphore, #tpu.memory_space<semaphore_mem>> -> memref<1x!tpu.dma_semaphore, #tpu.memory_space<semaphore_mem>>
    %111 = tpu.memref_squeeze %110 : memref<1x!tpu.dma_semaphore, #tpu.memory_space<semaphore_mem>> -> memref<!tpu.dma_semaphore, #tpu.memory_space<semaphore_mem>>
    tpu.wait_dma2 semaphore(%111 : memref<!tpu.dma_semaphore, #tpu.memory_space<semaphore_mem>>) src(%108 : memref<1x32xf32, #tpu.memory_space<any>>) dst(%109 : memref<1x32xf32, #tpu.memory_space<vmem>>)
    %c8_i32_88 = arith.constant 8 : i32
    %c0_i32_89 = arith.constant 0 : i32
    %c0_i32_90 = arith.constant 0 : i32
    %112 = tpu.memref_slice %arg2[%c0_i32_89, %c0_i32_90] : memref<50x32xf32, #tpu.memory_space<any>> -> memref<1x32xf32, #tpu.memory_space<any>>
    %c8_i32_91 = arith.constant 8 : i32
    %c0_i32_92 = arith.constant 0 : i32
    %113 = tpu.memref_slice %arg7[%c8_i32_91, %c0_i32_92] : memref<16x32xf32, #tpu.memory_space<vmem>> -> memref<1x32xf32, #tpu.memory_space<vmem>>
    %114 = tpu.memref_slice %arg8[%c8_i32_88] : memref<16x!tpu.dma_semaphore, #tpu.memory_space<semaphore_mem>> -> memref<1x!tpu.dma_semaphore, #tpu.memory_space<semaphore_mem>>
    %115 = tpu.memref_squeeze %114 : memref<1x!tpu.dma_semaphore, #tpu.memory_space<semaphore_mem>> -> memref<!tpu.dma_semaphore, #tpu.memory_space<semaphore_mem>>
    tpu.wait_dma2 semaphore(%115 : memref<!tpu.dma_semaphore, #tpu.memory_space<semaphore_mem>>) src(%112 : memref<1x32xf32, #tpu.memory_space<any>>) dst(%113 : memref<1x32xf32, #tpu.memory_space<vmem>>)
    %c9_i32_93 = arith.constant 9 : i32
    %c0_i32_94 = arith.constant 0 : i32
    %c0_i32_95 = arith.constant 0 : i32
    %116 = tpu.memref_slice %arg2[%c0_i32_94, %c0_i32_95] : memref<50x32xf32, #tpu.memory_space<any>> -> memref<1x32xf32, #tpu.memory_space<any>>
    %c9_i32_96 = arith.constant 9 : i32
    %c0_i32_97 = arith.constant 0 : i32
    %117 = tpu.memref_slice %arg7[%c9_i32_96, %c0_i32_97] : memref<16x32xf32, #tpu.memory_space<vmem>> -> memref<1x32xf32, #tpu.memory_space<vmem>>
    %118 = tpu.memref_slice %arg8[%c9_i32_93] : memref<16x!tpu.dma_semaphore, #tpu.memory_space<semaphore_mem>> -> memref<1x!tpu.dma_semaphore, #tpu.memory_space<semaphore_mem>>
    %119 = tpu.memref_squeeze %118 : memref<1x!tpu.dma_semaphore, #tpu.memory_space<semaphore_mem>> -> memref<!tpu.dma_semaphore, #tpu.memory_space<semaphore_mem>>
    tpu.wait_dma2 semaphore(%119 : memref<!tpu.dma_semaphore, #tpu.memory_space<semaphore_mem>>) src(%116 : memref<1x32xf32, #tpu.memory_space<any>>) dst(%117 : memref<1x32xf32, #tpu.memory_space<vmem>>)
    %c10_i32_98 = arith.constant 10 : i32
    %c0_i32_99 = arith.constant 0 : i32
    %c0_i32_100 = arith.constant 0 : i32
    %120 = tpu.memref_slice %arg2[%c0_i32_99, %c0_i32_100] : memref<50x32xf32, #tpu.memory_space<any>> -> memref<1x32xf32, #tpu.memory_space<any>>
    %c10_i32_101 = arith.constant 10 : i32
    %c0_i32_102 = arith.constant 0 : i32
    %121 = tpu.memref_slice %arg7[%c10_i32_101, %c0_i32_102] : memref<16x32xf32, #tpu.memory_space<vmem>> -> memref<1x32xf32, #tpu.memory_space<vmem>>
    %122 = tpu.memref_slice %arg8[%c10_i32_98] : memref<16x!tpu.dma_semaphore, #tpu.memory_space<semaphore_mem>> -> memref<1x!tpu.dma_semaphore, #tpu.memory_space<semaphore_mem>>
    %123 = tpu.memref_squeeze %122 : memref<1x!tpu.dma_semaphore, #tpu.memory_space<semaphore_mem>> -> memref<!tpu.dma_semaphore, #tpu.memory_space<semaphore_mem>>
    tpu.wait_dma2 semaphore(%123 : memref<!tpu.dma_semaphore, #tpu.memory_space<semaphore_mem>>) src(%120 : memref<1x32xf32, #tpu.memory_space<any>>) dst(%121 : memref<1x32xf32, #tpu.memory_space<vmem>>)
    %c11_i32_103 = arith.constant 11 : i32
    %c0_i32_104 = arith.constant 0 : i32
    %c0_i32_105 = arith.constant 0 : i32
    %124 = tpu.memref_slice %arg2[%c0_i32_104, %c0_i32_105] : memref<50x32xf32, #tpu.memory_space<any>> -> memref<1x32xf32, #tpu.memory_space<any>>
    %c11_i32_106 = arith.constant 11 : i32
    %c0_i32_107 = arith.constant 0 : i32
    %125 = tpu.memref_slice %arg7[%c11_i32_106, %c0_i32_107] : memref<16x32xf32, #tpu.memory_space<vmem>> -> memref<1x32xf32, #tpu.memory_space<vmem>>
    %126 = tpu.memref_slice %arg8[%c11_i32_103] : memref<16x!tpu.dma_semaphore, #tpu.memory_space<semaphore_mem>> -> memref<1x!tpu.dma_semaphore, #tpu.memory_space<semaphore_mem>>
    %127 = tpu.memref_squeeze %126 : memref<1x!tpu.dma_semaphore, #tpu.memory_space<semaphore_mem>> -> memref<!tpu.dma_semaphore, #tpu.memory_space<semaphore_mem>>
    tpu.wait_dma2 semaphore(%127 : memref<!tpu.dma_semaphore, #tpu.memory_space<semaphore_mem>>) src(%124 : memref<1x32xf32, #tpu.memory_space<any>>) dst(%125 : memref<1x32xf32, #tpu.memory_space<vmem>>)
    %c12_i32_108 = arith.constant 12 : i32
    %c0_i32_109 = arith.constant 0 : i32
    %c0_i32_110 = arith.constant 0 : i32
    %128 = tpu.memref_slice %arg2[%c0_i32_109, %c0_i32_110] : memref<50x32xf32, #tpu.memory_space<any>> -> memref<1x32xf32, #tpu.memory_space<any>>
    %c12_i32_111 = arith.constant 12 : i32
    %c0_i32_112 = arith.constant 0 : i32
    %129 = tpu.memref_slice %arg7[%c12_i32_111, %c0_i32_112] : memref<16x32xf32, #tpu.memory_space<vmem>> -> memref<1x32xf32, #tpu.memory_space<vmem>>
    %130 = tpu.memref_slice %arg8[%c12_i32_108] : memref<16x!tpu.dma_semaphore, #tpu.memory_space<semaphore_mem>> -> memref<1x!tpu.dma_semaphore, #tpu.memory_space<semaphore_mem>>
    %131 = tpu.memref_squeeze %130 : memref<1x!tpu.dma_semaphore, #tpu.memory_space<semaphore_mem>> -> memref<!tpu.dma_semaphore, #tpu.memory_space<semaphore_mem>>
    tpu.wait_dma2 semaphore(%131 : memref<!tpu.dma_semaphore, #tpu.memory_space<semaphore_mem>>) src(%128 : memref<1x32xf32, #tpu.memory_space<any>>) dst(%129 : memref<1x32xf32, #tpu.memory_space<vmem>>)
    %c13_i32_113 = arith.constant 13 : i32
    %c0_i32_114 = arith.constant 0 : i32
    %c0_i32_115 = arith.constant 0 : i32
    %132 = tpu.memref_slice %arg2[%c0_i32_114, %c0_i32_115] : memref<50x32xf32, #tpu.memory_space<any>> -> memref<1x32xf32, #tpu.memory_space<any>>
    %c13_i32_116 = arith.constant 13 : i32
    %c0_i32_117 = arith.constant 0 : i32
    %133 = tpu.memref_slice %arg7[%c13_i32_116, %c0_i32_117] : memref<16x32xf32, #tpu.memory_space<vmem>> -> memref<1x32xf32, #tpu.memory_space<vmem>>
    %134 = tpu.memref_slice %arg8[%c13_i32_113] : memref<16x!tpu.dma_semaphore, #tpu.memory_space<semaphore_mem>> -> memref<1x!tpu.dma_semaphore, #tpu.memory_space<semaphore_mem>>
    %135 = tpu.memref_squeeze %134 : memref<1x!tpu.dma_semaphore, #tpu.memory_space<semaphore_mem>> -> memref<!tpu.dma_semaphore, #tpu.memory_space<semaphore_mem>>
    tpu.wait_dma2 semaphore(%135 : memref<!tpu.dma_semaphore, #tpu.memory_space<semaphore_mem>>) src(%132 : memref<1x32xf32, #tpu.memory_space<any>>) dst(%133 : memref<1x32xf32, #tpu.memory_space<vmem>>)
    %c14_i32_118 = arith.constant 14 : i32
    %c0_i32_119 = arith.constant 0 : i32
    %c0_i32_120 = arith.constant 0 : i32
    %136 = tpu.memref_slice %arg2[%c0_i32_119, %c0_i32_120] : memref<50x32xf32, #tpu.memory_space<any>> -> memref<1x32xf32, #tpu.memory_space<any>>
    %c14_i32_121 = arith.constant 14 : i32
    %c0_i32_122 = arith.constant 0 : i32
    %137 = tpu.memref_slice %arg7[%c14_i32_121, %c0_i32_122] : memref<16x32xf32, #tpu.memory_space<vmem>> -> memref<1x32xf32, #tpu.memory_space<vmem>>
    %138 = tpu.memref_slice %arg8[%c14_i32_118] : memref<16x!tpu.dma_semaphore, #tpu.memory_space<semaphore_mem>> -> memref<1x!tpu.dma_semaphore, #tpu.memory_space<semaphore_mem>>
    %139 = tpu.memref_squeeze %138 : memref<1x!tpu.dma_semaphore, #tpu.memory_space<semaphore_mem>> -> memref<!tpu.dma_semaphore, #tpu.memory_space<semaphore_mem>>
    tpu.wait_dma2 semaphore(%139 : memref<!tpu.dma_semaphore, #tpu.memory_space<semaphore_mem>>) src(%136 : memref<1x32xf32, #tpu.memory_space<any>>) dst(%137 : memref<1x32xf32, #tpu.memory_space<vmem>>)
    %c15_i32_123 = arith.constant 15 : i32
    %c0_i32_124 = arith.constant 0 : i32
    %c0_i32_125 = arith.constant 0 : i32
    %140 = tpu.memref_slice %arg2[%c0_i32_124, %c0_i32_125] : memref<50x32xf32, #tpu.memory_space<any>> -> memref<1x32xf32, #tpu.memory_space<any>>
    %c15_i32_126 = arith.constant 15 : i32
    %c0_i32_127 = arith.constant 0 : i32
    %141 = tpu.memref_slice %arg7[%c15_i32_126, %c0_i32_127] : memref<16x32xf32, #tpu.memory_space<vmem>> -> memref<1x32xf32, #tpu.memory_space<vmem>>
    %142 = tpu.memref_slice %arg8[%c15_i32_123] : memref<16x!tpu.dma_semaphore, #tpu.memory_space<semaphore_mem>> -> memref<1x!tpu.dma_semaphore, #tpu.memory_space<semaphore_mem>>
    %143 = tpu.memref_squeeze %142 : memref<1x!tpu.dma_semaphore, #tpu.memory_space<semaphore_mem>> -> memref<!tpu.dma_semaphore, #tpu.memory_space<semaphore_mem>>
    tpu.wait_dma2 semaphore(%143 : memref<!tpu.dma_semaphore, #tpu.memory_space<semaphore_mem>>) src(%140 : memref<1x32xf32, #tpu.memory_space<any>>) dst(%141 : memref<1x32xf32, #tpu.memory_space<vmem>>)
    %c0_128 = arith.constant 0 : index
    %c0_129 = arith.constant 0 : index
    %144 = vector.load %arg7[%c0_128, %c0_129] : memref<16x32xf32, #tpu.memory_space<vmem>>, vector<16x32xf32>
    %145 = vector.extract_strided_slice %144 {offsets = [0, 0], sizes = [2, 32], strides = [1, 1]} : vector<16x32xf32> to vector<2x32xf32>
    %146 = vector.extract_strided_slice %144 {offsets = [2, 0], sizes = [2, 32], strides = [1, 1]} : vector<16x32xf32> to vector<2x32xf32>
    %147 = arith.addf %145, %146 : vector<2x32xf32>
    %148 = vector.extract_strided_slice %144 {offsets = [4, 0], sizes = [2, 32], strides = [1, 1]} : vector<16x32xf32> to vector<2x32xf32>
    %149 = arith.addf %147, %148 : vector<2x32xf32>
    %150 = vector.extract_strided_slice %144 {offsets = [6, 0], sizes = [2, 32], strides = [1, 1]} : vector<16x32xf32> to vector<2x32xf32>
    %151 = arith.addf %149, %150 : vector<2x32xf32>
    %152 = vector.extract_strided_slice %144 {offsets = [8, 0], sizes = [2, 32], strides = [1, 1]} : vector<16x32xf32> to vector<2x32xf32>
    %153 = arith.addf %151, %152 : vector<2x32xf32>
    %154 = vector.extract_strided_slice %144 {offsets = [10, 0], sizes = [2, 32], strides = [1, 1]} : vector<16x32xf32> to vector<2x32xf32>
    %155 = arith.addf %153, %154 : vector<2x32xf32>
    %156 = vector.extract_strided_slice %144 {offsets = [12, 0], sizes = [2, 32], strides = [1, 1]} : vector<16x32xf32> to vector<2x32xf32>
    %157 = arith.addf %155, %156 : vector<2x32xf32>
    %158 = vector.extract_strided_slice %144 {offsets = [14, 0], sizes = [2, 32], strides = [1, 1]} : vector<16x32xf32> to vector<2x32xf32>
    %159 = arith.addf %157, %158 : vector<2x32xf32>
    %160 = vector.shape_cast %159 : vector<2x32xf32> to vector<2x1x32xf32>
    %c0_130 = arith.constant 0 : index
    %c0_131 = arith.constant 0 : index
    %161 = vector.load %arg3[%c0_130, %c0_131] : memref<16x32xf32, #tpu.memory_space<vmem>>, vector<16x32xf32>
    %162 = vector.shape_cast %161 : vector<16x32xf32> to vector<1x16x32xf32>
    %163 = vector.broadcast %160 : vector<2x1x32xf32> to vector<2x16x32xf32>
    %164 = vector.broadcast %162 : vector<1x16x32xf32> to vector<2x16x32xf32>
    %165 = arith.mulf %163, %164 : vector<2x16x32xf32>
    %cst = arith.constant dense<0.000000e+00> : vector<2x16xf32>
    %166 = vector.multi_reduction <add>, %165, %cst [2] : vector<2x16x32xf32> to vector<2x16xf32>
    %c0_132 = arith.constant 0 : index
    %c0_133 = arith.constant 0 : index
    %167 = vector.load %arg4[%c0_132, %c0_133] : memref<1x16xf32, #tpu.memory_space<vmem>>, vector<1x16xf32>
    %cst_134 = arith.constant 8.000000e+00 : f32
    %168 = vector.broadcast %cst_134 : f32 to vector<1x16xf32>
    %169 = arith.mulf %168, %167 : vector<1x16xf32>
    %170 = vector.broadcast %169 : vector<1x16xf32> to vector<2x16xf32>
    %171 = arith.addf %166, %170 : vector<2x16xf32>
    %cst_135 = arith.constant dense<0xFF800000> : vector<2xf32>
    %172 = vector.multi_reduction <maximumf>, %171, %cst_135 [1] : vector<2x16xf32> to vector<2xf32>
    %173 = vector.shape_cast %172 : vector<2xf32> to vector<2x1xf32>
    %174 = vector.broadcast %173 : vector<2x1xf32> to vector<2x16xf32>
    %175 = arith.subf %171, %174 : vector<2x16xf32>
    %176 = math.exp %175 : vector<2x16xf32>
    %cst_136 = arith.constant dense<0.000000e+00> : vector<2xf32>
    %177 = vector.multi_reduction <add>, %176, %cst_136 [1] : vector<2x16xf32> to vector<2xf32>
    %178 = vector.shape_cast %177 : vector<2xf32> to vector<2x1xf32>
    %179 = tpu.reciprocal %178 {approx = true} : vector<2x1xf32> -> vector<2x1xf32>
    %180 = vector.broadcast %179 : vector<2x1xf32> to vector<2x16xf32>
    %181 = arith.mulf %176, %180 : vector<2x16xf32>
    %c0_137 = arith.constant 0 : index
    %c0_138 = arith.constant 0 : index
    %182 = vector.load %arg5[%c0_137, %c0_138] : memref<32x16xf32, #tpu.memory_space<vmem>>, vector<32x16xf32>
    %183 = vector.shape_cast %182 : vector<32x16xf32> to vector<1x32x16xf32>
    %184 = vector.shape_cast %181 : vector<2x16xf32> to vector<2x1x16xf32>
    %185 = vector.broadcast %183 : vector<1x32x16xf32> to vector<2x32x16xf32>
    %186 = vector.broadcast %184 : vector<2x1x16xf32> to vector<2x32x16xf32>
    %187 = arith.mulf %185, %186 : vector<2x32x16xf32>
    %cst_139 = arith.constant dense<0.000000e+00> : vector<2x32xf32>
    %188 = vector.multi_reduction <add>, %187, %cst_139 [2] : vector<2x32x16xf32> to vector<2x32xf32>
    %cst_140 = arith.constant 1.250000e-01 : f32
    %189 = vector.broadcast %cst_140 : f32 to vector<2x32xf32>
    %190 = arith.mulf %159, %189 : vector<2x32xf32>
    %191 = arith.addf %190, %188 : vector<2x32xf32>
    %192 = tpu.concatenate %188, %188, %188, %188, %188, %188, %188, %188 in 0 : vector<2x32xf32>, vector<2x32xf32>, vector<2x32xf32>, vector<2x32xf32>, vector<2x32xf32>, vector<2x32xf32>, vector<2x32xf32>, vector<2x32xf32> -> vector<16x32xf32>
    %193 = arith.addf %144, %192 : vector<16x32xf32>
    %194 = tpu.concatenate %193, %191, %188 in 0 : vector<16x32xf32>, vector<2x32xf32>, vector<2x32xf32> -> vector<20x32xf32>
    %c0_141 = arith.constant 0 : index
    %c0_142 = arith.constant 0 : index
    %195 = vector.load %arg6[%c0_141, %c0_142] : memref<20x32xf32, #tpu.memory_space<vmem>>, vector<20x32xf32>
    tpu.vector_store %arg6[%c0_141, %c0_142], %194 {strides = array<i32>} : memref<20x32xf32, #tpu.memory_space<vmem>>, vector<20x32xf32>,
    return
  }
  func.func @transform_1(%arg0: i32, %arg1: memref<16xi32, #tpu.memory_space<smem>>) -> (i32, i32) {
    %c0_i32 = arith.constant 0 : i32
    %c0_i32_0 = arith.constant 0 : i32
    %c0_i32_1 = arith.constant 0 : i32
    return %c0_i32, %c0_i32_0 : i32, i32
  }
  func.func @transform_2(%arg0: i32, %arg1: memref<16xi32, #tpu.memory_space<smem>>) -> (i32, i32) {
    %c0_i32 = arith.constant 0 : i32
    %c0_i32_0 = arith.constant 0 : i32
    %c0_i32_1 = arith.constant 0 : i32
    return %c0_i32, %c0_i32_0 : i32, i32
  }
  func.func @transform_3(%arg0: i32, %arg1: memref<16xi32, #tpu.memory_space<smem>>) -> (i32, i32) {
    %c0_i32 = arith.constant 0 : i32
    %c0_i32_0 = arith.constant 0 : i32
    %c0_i32_1 = arith.constant 0 : i32
    return %c0_i32, %c0_i32_0 : i32, i32
  }
  func.func @transform_4(%arg0: i32, %arg1: memref<16xi32, #tpu.memory_space<smem>>) -> (i32, i32) {
    %c0_i32 = arith.constant 0 : i32
    %c0_i32_0 = arith.constant 0 : i32
    %c0_i32_1 = arith.constant 0 : i32
    return %c0_i32, %c0_i32_0 : i32, i32
  }
}

</mosaic_0001>

<llo_original>
// kernel: tpu_custom_call.1
$region0: #{tpu_custom_call.1}
  #allocation0 [shape = 'u32[]', space=smem, size = 0x4, offset = 0x4, fixed_abs, tag = 'smem constant byte address 0x4 - core index']
  #allocation1 [shape = 'u32[144,128]{1,0:T(1,128)}', space=vmem, size = 0x12000, scoped, tag = 'internal scratch']
  #allocation2 [shape = 'f32[16,32]{1,0:T(8,128)}', space=vmem, size = 0x2000, scoped, tag = 'scratch operand']
  #allocation3 [shape = 's32[16]{0}', space=sflag, size = 0x40, scoped, tag = 'scratch operand']
  #allocation4 [shape = 's32[1]{0}', space=sflag, size = 0x4, scoped, tag = 'scoped memory for tpu_custom_call.1']
  #allocation5 [shape = 'u8[512]{0}', space=smem, size = 0x200, scoped, tag = 'prefetched SMEM operand 0']
  #allocation8 [shape = 's32[]', space=sflag, size = 0x4, offset = 0, fixed_abs, tag = 'sflag constant byte address 0x0 - dummy sync flag']
  #allocation9 [shape = 's32[]', space=sflag, size = 0x4, offset = 0, fixed_abs, tag = 'sflag constant byte address 0x0 - dummy sync flag']
  #allocation10 [shape = 's32[]', space=sflag, size = 0x4, offset = 0, fixed_abs, tag = 'sflag constant byte address 0x0 - dummy sync flag']
  #allocation11 [shape = 's32[]', space=sflag, size = 0x4, offset = 0, fixed_abs, tag = 'sflag constant byte address 0x0 - dummy sync flag']
  #allocation12 [shape = 's32[]', space=sflag, size = 0x4, offset = 0, fixed_abs, tag = 'sflag constant byte address 0x0 - dummy sync flag']
  #allocation13 [shape = 's32[]', space=sflag, size = 0x4, offset = 0, fixed_abs, tag = 'sflag constant byte address 0x0 - dummy sync flag']
  #allocation14 [shape = 's32[]', space=sflag, size = 0x4, offset = 0, fixed_abs, tag = 'sflag constant byte address 0x0 - dummy sync flag']
  #allocation15 [shape = 's32[]', space=sflag, size = 0x4, offset = 0, fixed_abs, tag = 'sflag constant byte address 0x0 - dummy sync flag']
  #allocation16 [shape = 's32[]', space=sflag, size = 0x4, offset = 0, fixed_abs, tag = 'sflag constant byte address 0x0 - dummy sync flag']
  #allocation17 [shape = 's32[]', space=sflag, size = 0x4, offset = 0, fixed_abs, tag = 'sflag constant byte address 0x0 - dummy sync flag']
  #allocation18 [shape = 's32[]', space=sflag, size = 0x4, offset = 0, fixed_abs, tag = 'sflag constant byte address 0x0 - dummy sync flag']
  #allocation19 [shape = 's32[]', space=sflag, size = 0x4, offset = 0, fixed_abs, tag = 'sflag constant byte address 0x0 - dummy sync flag']
  #allocation20 [shape = 's32[]', space=sflag, size = 0x4, offset = 0, fixed_abs, tag = 'sflag constant byte address 0x0 - dummy sync flag']
  #allocation21 [shape = 's32[]', space=sflag, size = 0x4, offset = 0, fixed_abs, tag = 'sflag constant byte address 0x0 - dummy sync flag']
  #allocation22 [shape = 's32[]', space=sflag, size = 0x4, offset = 0, fixed_abs, tag = 'sflag constant byte address 0x0 - dummy sync flag']
  #allocation23 [shape = 's32[]', space=sflag, size = 0x4, offset = 0, fixed_abs, tag = 'sflag constant byte address 0x0 - dummy sync flag']
  %s0 = inlined_call_operand.vmem [shape: s32[16], index: 0, kind: input, shape index: {}]
  %s1 = inlined_call_operand.vmem [shape: f32[50,32], index: 1, kind: input, shape index: {}]
  %s2 = inlined_call_operand.vmem [shape: f32[16,32], index: 2, kind: input, shape index: {}]
  %s3 = inlined_call_operand.vmem [shape: f32[1,16], index: 3, kind: input, shape index: {}]
  %s4 = inlined_call_operand.vmem [shape: f32[32,16], index: 4, kind: input, shape index: {}]
  %s5 = inlined_call_operand.hbm [shape: f32[20,32], index: 5, kind: output, shape index: {}]
  %s6 = sld [smem:[#allocation0]]
  $region502: #{tpu_custom_call.1} parent=0
    _
  %s8 = ssub.s32 1, %s6
  %s9 = scalar_select 0, %s8, %s6
  %s10 = sshll.u32 %s0, 4
  %s11 = int_to_ptr.vmem [resolvable:$true] %s10
  %13 = dma.vmem_to_smem %s11, 16, [#allocation5], [#allocation4]
  %14 = dma.done [#allocation4], 16
  %15 = sfence
  $region1: #{tpu_custom_call.1} parent=0
    #allocation6 [shape = 'u8[12288]{0}', space=vmem, size = 0x3000, scoped, tag = 'output window, operand 0, single buffered']
    #allocation7 [shape = 's32[1]{0}', space=sflag, size = 0x4, scoped, tag = 'scoped memory for tpu_custom_call.1']
    %16 = vsyncpa [#allocation7], 0
    // Predicated region
    $region2: #{tpu_custom_call.1} parent=1 // pred_check
      _
    $region3: #{tpu_custom_call.1} parent=1 // pred_check_branch
      %18 = sbr.rel (0) target = $region5
    $region4: #{tpu_custom_call.1} parent=1 // pred_region
      _
    $region5: #{tpu_custom_call.1} parent=1 // pred_fallthru
      _
    // Predicated region
    $region6: #{tpu_custom_call.1} parent=1 // pred_check
      _
    $region7: #{tpu_custom_call.1} parent=1 // pred_check_branch
      %20 = sbr.rel (0) target = $region9
    $region8: #{tpu_custom_call.1} parent=1 // pred_region
      _
    $region9: #{tpu_custom_call.1} parent=1 // pred_fallthru
      _
    // Predicated region
    $region10: #{tpu_custom_call.1} parent=1 // pred_check
      _
    $region11: #{tpu_custom_call.1} parent=1 // pred_check_branch
      %22 = sbr.rel (0) target = $region13
    $region12: #{tpu_custom_call.1} parent=1 // pred_region
      _
    $region13: #{tpu_custom_call.1} parent=1 // pred_fallthru
      _
    %s23 = sld [smem:[#allocation5]]
    %s24 = scalar_lea.vmem %s1, %s23
    %p26 = scmp.lt.u32.totalorder 1, 8
    %p27 = pneg %p26
    // Predicated region
    $region14: #{tpu_custom_call.1} parent=1 // pred_check
      _
    $region15: #{tpu_custom_call.1} parent=1 // pred_check_branch
      %29 = sbr.rel (%p26) target = $region17
    $region16: #{tpu_custom_call.1} parent=1 // pred_region
      %s44 = sand.u32 1, 7
      %p45 = scmp.eq.s32.totalorder %s44, 0
      %p46 = pneg %p45
      // Predicated region
      $region29: #{tpu_custom_call.1} parent=16 // pred_check
        _
      $region30: #{tpu_custom_call.1} parent=16 // pred_check_branch
        %48 = sbr.rel (%p45) target = $region32
      $region31: #{tpu_custom_call.1} parent=16 // pred_region
        %s49 = sand.u32 1, 7
        %s50 = ssub.s32 1, %s49
        %s51 = scalar_lea.vmem %s24, %s50
        %s52 = ssub.s32 1, %s49
        %s53 = scalar_lea.vmem [#allocation2], %s52
        %s54 = sshllo.u32 0, %s49
        loop: start=0, step=1, limit=1
        $region33: #{tpu_custom_call.1} parent=31 // loop_pre_header
          _
        $region34: #{tpu_custom_call.1} parent=31 // loop_header
          %s56 = sphi 0, %s60
          %p57 = scmp.ge.s32.totalorder %s56, 1
          %s61 = sphi %s51, %s51
          %s62 = sphi %s53, %s53
        $region35: #{tpu_custom_call.1} parent=31 // loop_header_branch
          %59 = sbr.rel (%p57) target = $region39
        $region36: #{tpu_custom_call.1} parent=31 // loop_body
          %v63 = vld [vmem:[%s61] sm:%s54]
          %64 = vst [vmem:[%s62] sm:%s54] %v63
        $region37: #{tpu_custom_call.1} parent=31 // loop_footer
          %s60 = sadd.s32 1, %s56
        $region38: #{tpu_custom_call.1} parent=31 // loop_footer_branch
          %55 = sbr.rel target = $region34
        $region39: #{tpu_custom_call.1} parent=31 // loop_exit
          _
      $region32: #{tpu_custom_call.1} parent=16 // pred_fallthru
        _
    $region17: #{tpu_custom_call.1} parent=1 // pred_fallthru
      _
    // Predicated region
    $region18: #{tpu_custom_call.1} parent=1 // pred_check
      %p30 = pneg %p26
    $region19: #{tpu_custom_call.1} parent=1 // pred_check_branch
      %32 = sbr.rel (%p30) target = $region21
    $region20: #{tpu_custom_call.1} parent=1 // pred_region
      %s33 = sshllo.u32 0, 1
      loop: start=0, step=1, limit=1
      $region22: #{tpu_custom_call.1} parent=20 // loop_pre_header
        _
      $region23: #{tpu_custom_call.1} parent=20 // loop_header
        %s35 = sphi 0, %s39
        %p36 = scmp.ge.s32.totalorder %s35, 1
        %s40 = sphi %s24, %s24
        %s41 = sphi [#allocation2], [#allocation2]
      $region24: #{tpu_custom_call.1} parent=20 // loop_header_branch
        %38 = sbr.rel (%p36) target = $region28
      $region25: #{tpu_custom_call.1} parent=20 // loop_body
        %v42 = vld [vmem:[%s40] sm:%s33]
        %43 = vst [vmem:[%s41] sm:%s33] %v42
      $region26: #{tpu_custom_call.1} parent=20 // loop_footer
        %s39 = sadd.s32 1, %s35
      $region27: #{tpu_custom_call.1} parent=20 // loop_footer_branch
        %34 = sbr.rel target = $region23
      $region28: #{tpu_custom_call.1} parent=20 // loop_exit
        _
    $region21: #{tpu_custom_call.1} parent=1 // pred_fallthru
      _
    // Predicated region
    $region40: #{tpu_custom_call.1} parent=1 // pred_check
      _
    $region41: #{tpu_custom_call.1} parent=1 // pred_check_branch
      %67 = sbr.rel (0) target = $region43
    $region42: #{tpu_custom_call.1} parent=1 // pred_region
      %68 = vsyncadd [#allocation3], 16
    $region43: #{tpu_custom_call.1} parent=1 // pred_fallthru
      _
    %s69 = sld [smem:[#allocation5 + $0x1]]
    %s70 = scalar_lea.vmem %s1, %s69
    %s71 = scalar_lea.vmem [#allocation2], 1
    %s72 = scalar_lea.sflag [#allocation3], 1
    %p74 = scmp.lt.u32.totalorder 1, 8
    %p75 = pneg %p74
    // Predicated region
    $region44: #{tpu_custom_call.1} parent=1 // pred_check
      _
    $region45: #{tpu_custom_call.1} parent=1 // pred_check_branch
      %77 = sbr.rel (%p74) target = $region47
    $region46: #{tpu_custom_call.1} parent=1 // pred_region
      %s92 = sand.u32 1, 7
      %p93 = scmp.eq.s32.totalorder %s92, 0
      %p94 = pneg %p93
      // Predicated region
      $region59: #{tpu_custom_call.1} parent=46 // pred_check
        _
      $region60: #{tpu_custom_call.1} parent=46 // pred_check_branch
        %96 = sbr.rel (%p93) target = $region62
      $region61: #{tpu_custom_call.1} parent=46 // pred_region
        %s97 = sand.u32 1, 7
        %s98 = ssub.s32 1, %s97
        %s99 = scalar_lea.vmem %s70, %s98
        %s100 = ssub.s32 1, %s97
        %s101 = scalar_lea.vmem %s71, %s100 [#allocation2]
        %s102 = sshllo.u32 0, %s97
        loop: start=0, step=1, limit=1
        $region63: #{tpu_custom_call.1} parent=61 // loop_pre_header
          _
        $region64: #{tpu_custom_call.1} parent=61 // loop_header
          %s104 = sphi 0, %s108
          %p105 = scmp.ge.s32.totalorder %s104, 1
          %s109 = sphi %s99, %s99
          %s110 = sphi %s101, %s101
        $region65: #{tpu_custom_call.1} parent=61 // loop_header_branch
          %107 = sbr.rel (%p105) target = $region69
        $region66: #{tpu_custom_call.1} parent=61 // loop_body
          %v111 = vld [vmem:[%s109] sm:%s102]
          %112 = vst [vmem:[%s110] sm:%s102] %v111
        $region67: #{tpu_custom_call.1} parent=61 // loop_footer
          %s108 = sadd.s32 1, %s104
        $region68: #{tpu_custom_call.1} parent=61 // loop_footer_branch
          %103 = sbr.rel target = $region64
        $region69: #{tpu_custom_call.1} parent=61 // loop_exit
          _
      $region62: #{tpu_custom_call.1} parent=46 // pred_fallthru
        _
    $region47: #{tpu_custom_call.1} parent=1 // pred_fallthru
      _
    // Predicated region
    $region48: #{tpu_custom_call.1} parent=1 // pred_check
      %p78 = pneg %p74
    $region49: #{tpu_custom_call.1} parent=1 // pred_check_branch
      %80 = sbr.rel (%p78) target = $region51
    $region50: #{tpu_custom_call.1} parent=1 // pred_region
      %s81 = sshllo.u32 0, 1
      loop: start=0, step=1, limit=1
      $region52: #{tpu_custom_call.1} parent=50 // loop_pre_header
        _
      $region53: #{tpu_custom_call.1} parent=50 // loop_header
        %s83 = sphi 0, %s87
        %p84 = scmp.ge.s32.totalorder %s83, 1
        %s88 = sphi %s70, %s70
        %s89 = sphi %s71, %s71
      $region54: #{tpu_custom_call.1} parent=50 // loop_header_branch
        %86 = sbr.rel (%p84) target = $region58
      $region55: #{tpu_custom_call.1} parent=50 // loop_body
        %v90 = vld [vmem:[%s88] sm:%s81]
        %91 = vst [vmem:[%s89] sm:%s81] %v90
      $region56: #{tpu_custom_call.1} parent=50 // loop_footer
        %s87 = sadd.s32 1, %s83
      $region57: #{tpu_custom_call.1} parent=50 // loop_footer_branch
        %82 = sbr.rel target = $region53
      $region58: #{tpu_custom_call.1} parent=50 // loop_exit
        _
    $region51: #{tpu_custom_call.1} parent=1 // pred_fallthru
      _
    // Predicated region
    $region70: #{tpu_custom_call.1} parent=1 // pred_check
      _
    $region71: #{tpu_custom_call.1} parent=1 // pred_check_branch
      %115 = sbr.rel (0) target = $region73
    $region72: #{tpu_custom_call.1} parent=1 // pred_region
      %116 = vsyncadd %s72, 16
    $region73: #{tpu_custom_call.1} parent=1 // pred_fallthru
      _
    %s117 = sld [smem:[#allocation5 + $0x2]]
    %s118 = scalar_lea.vmem %s1, %s117
    %s119 = scalar_lea.vmem [#allocation2], 2
    %s120 = scalar_lea.sflag [#allocation3], 2
    %p122 = scmp.lt.u32.totalorder 1, 8
    %p123 = pneg %p122
    // Predicated region
    $region74: #{tpu_custom_call.1} parent=1 // pred_check
      _
    $region75: #{tpu_custom_call.1} parent=1 // pred_check_branch
      %125 = sbr.rel (%p122) target = $region77
    $region76: #{tpu_custom_call.1} parent=1 // pred_region
      %s140 = sand.u32 1, 7
      %p141 = scmp.eq.s32.totalorder %s140, 0
      %p142 = pneg %p141
      // Predicated region
      $region89: #{tpu_custom_call.1} parent=76 // pred_check
        _
      $region90: #{tpu_custom_call.1} parent=76 // pred_check_branch
        %144 = sbr.rel (%p141) target = $region92
      $region91: #{tpu_custom_call.1} parent=76 // pred_region
        %s145 = sand.u32 1, 7
        %s146 = ssub.s32 1, %s145
        %s147 = scalar_lea.vmem %s118, %s146
        %s148 = ssub.s32 1, %s145
        %s149 = scalar_lea.vmem %s119, %s148 [#allocation2]
        %s150 = sshllo.u32 0, %s145
        loop: start=0, step=1, limit=1
        $region93: #{tpu_custom_call.1} parent=91 // loop_pre_header
          _
        $region94: #{tpu_custom_call.1} parent=91 // loop_header
          %s152 = sphi 0, %s156
          %p153 = scmp.ge.s32.totalorder %s152, 1
          %s157 = sphi %s147, %s147
          %s158 = sphi %s149, %s149
        $region95: #{tpu_custom_call.1} parent=91 // loop_header_branch
          %155 = sbr.rel (%p153) target = $region99
        $region96: #{tpu_custom_call.1} parent=91 // loop_body
          %v159 = vld [vmem:[%s157] sm:%s150]
          %160 = vst [vmem:[%s158] sm:%s150] %v159
        $region97: #{tpu_custom_call.1} parent=91 // loop_footer
          %s156 = sadd.s32 1, %s152
        $region98: #{tpu_custom_call.1} parent=91 // loop_footer_branch
          %151 = sbr.rel target = $region94
        $region99: #{tpu_custom_call.1} parent=91 // loop_exit
          _
      $region92: #{tpu_custom_call.1} parent=76 // pred_fallthru
        _
    $region77: #{tpu_custom_call.1} parent=1 // pred_fallthru
      _
    // Predicated region
    $region78: #{tpu_custom_call.1} parent=1 // pred_check
      %p126 = pneg %p122
    $region79: #{tpu_custom_call.1} parent=1 // pred_check_branch
      %128 = sbr.rel (%p126) target = $region81
    $region80: #{tpu_custom_call.1} parent=1 // pred_region
      %s129 = sshllo.u32 0, 1
      loop: start=0, step=1, limit=1
      $region82: #{tpu_custom_call.1} parent=80 // loop_pre_header
        _
      $region83: #{tpu_custom_call.1} parent=80 // loop_header
        %s131 = sphi 0, %s135
        %p132 = scmp.ge.s32.totalorder %s131, 1
        %s136 = sphi %s118, %s118
        %s137 = sphi %s119, %s119
      $region84: #{tpu_custom_call.1} parent=80 // loop_header_branch
        %134 = sbr.rel (%p132) target = $region88
      $region85: #{tpu_custom_call.1} parent=80 // loop_body
        %v138 = vld [vmem:[%s136] sm:%s129]
        %139 = vst [vmem:[%s137] sm:%s129] %v138
      $region86: #{tpu_custom_call.1} parent=80 // loop_footer
        %s135 = sadd.s32 1, %s131
      $region87: #{tpu_custom_call.1} parent=80 // loop_footer_branch
        %130 = sbr.rel target = $region83
      $region88: #{tpu_custom_call.1} parent=80 // loop_exit
        _
    $region81: #{tpu_custom_call.1} parent=1 // pred_fallthru
      _
    // Predicated region
    $region100: #{tpu_custom_call.1} parent=1 // pred_check
      _
    $region101: #{tpu_custom_call.1} parent=1 // pred_check_branch
      %163 = sbr.rel (0) target = $region103
    $region102: #{tpu_custom_call.1} parent=1 // pred_region
      %164 = vsyncadd %s120, 16
    $region103: #{tpu_custom_call.1} parent=1 // pred_fallthru
      _
    %s165 = sld [smem:[#allocation5 + $0x3]]
    %s166 = scalar_lea.vmem %s1, %s165
    %s167 = scalar_lea.vmem [#allocation2], 3
    %s168 = scalar_lea.sflag [#allocation3], 3
    %p170 = scmp.lt.u32.totalorder 1, 8
    %p171 = pneg %p170
    // Predicated region
    $region104: #{tpu_custom_call.1} parent=1 // pred_check
      _
    $region105: #{tpu_custom_call.1} parent=1 // pred_check_branch
      %173 = sbr.rel (%p170) target = $region107
    $region106: #{tpu_custom_call.1} parent=1 // pred_region
      %s188 = sand.u32 1, 7
      %p189 = scmp.eq.s32.totalorder %s188, 0
      %p190 = pneg %p189
      // Predicated region
      $region119: #{tpu_custom_call.1} parent=106 // pred_check
        _
      $region120: #{tpu_custom_call.1} parent=106 // pred_check_branch
        %192 = sbr.rel (%p189) target = $region122
      $region121: #{tpu_custom_call.1} parent=106 // pred_region
        %s193 = sand.u32 1, 7
        %s194 = ssub.s32 1, %s193
        %s195 = scalar_lea.vmem %s166, %s194
        %s196 = ssub.s32 1, %s193
        %s197 = scalar_lea.vmem %s167, %s196 [#allocation2]
        %s198 = sshllo.u32 0, %s193
        loop: start=0, step=1, limit=1
        $region123: #{tpu_custom_call.1} parent=121 // loop_pre_header
          _
        $region124: #{tpu_custom_call.1} parent=121 // loop_header
          %s200 = sphi 0, %s204
          %p201 = scmp.ge.s32.totalorder %s200, 1
          %s205 = sphi %s195, %s195
          %s206 = sphi %s197, %s197
        $region125: #{tpu_custom_call.1} parent=121 // loop_header_branch
          %203 = sbr.rel (%p201) target = $region129
        $region126: #{tpu_custom_call.1} parent=121 // loop_body
          %v207 = vld [vmem:[%s205] sm:%s198]
          %208 = vst [vmem:[%s206] sm:%s198] %v207
        $region127: #{tpu_custom_call.1} parent=121 // loop_footer
          %s204 = sadd.s32 1, %s200
        $region128: #{tpu_custom_call.1} parent=121 // loop_footer_branch
          %199 = sbr.rel target = $region124
        $region129: #{tpu_custom_call.1} parent=121 // loop_exit
          _
      $region122: #{tpu_custom_call.1} parent=106 // pred_fallthru
        _
    $region107: #{tpu_custom_call.1} parent=1 // pred_fallthru
      _
    // Predicated region
    $region108: #{tpu_custom_call.1} parent=1 // pred_check
      %p174 = pneg %p170
    $region109: #{tpu_custom_call.1} parent=1 // pred_check_branch
      %176 = sbr.rel (%p174) target = $region111
    $region110: #{tpu_custom_call.1} parent=1 // pred_region
      %s177 = sshllo.u32 0, 1
      loop: start=0, step=1, limit=1
      $region112: #{tpu_custom_call.1} parent=110 // loop_pre_header
        _
      $region113: #{tpu_custom_call.1} parent=110 // loop_header
        %s179 = sphi 0, %s183
        %p180 = scmp.ge.s32.totalorder %s179, 1
        %s184 = sphi %s166, %s166
        %s185 = sphi %s167, %s167
      $region114: #{tpu_custom_call.1} parent=110 // loop_header_branch
        %182 = sbr.rel (%p180) target = $region118
      $region115: #{tpu_custom_call.1} parent=110 // loop_body
        %v186 = vld [vmem:[%s184] sm:%s177]
        %187 = vst [vmem:[%s185] sm:%s177] %v186
      $region116: #{tpu_custom_call.1} parent=110 // loop_footer
        %s183 = sadd.s32 1, %s179
      $region117: #{tpu_custom_call.1} parent=110 // loop_footer_branch
        %178 = sbr.rel target = $region113
      $region118: #{tpu_custom_call.1} parent=110 // loop_exit
        _
    $region111: #{tpu_custom_call.1} parent=1 // pred_fallthru
      _
    // Predicated region
    $region130: #{tpu_custom_call.1} parent=1 // pred_check
      _
    $region131: #{tpu_custom_call.1} parent=1 // pred_check_branch
      %211 = sbr.rel (0) target = $region133
    $region132: #{tpu_custom_call.1} parent=1 // pred_region
      %212 = vsyncadd %s168, 16
    $region133: #{tpu_custom_call.1} parent=1 // pred_fallthru
      _
    %s213 = sld [smem:[#allocation5 + $0x4]]
    %s214 = scalar_lea.vmem %s1, %s213
    %s215 = scalar_lea.vmem [#allocation2], 4
    %s216 = scalar_lea.sflag [#allocation3], 4
    %p218 = scmp.lt.u32.totalorder 1, 8
    %p219 = pneg %p218
    // Predicated region
    $region134: #{tpu_custom_call.1} parent=1 // pred_check
      _
    $region135: #{tpu_custom_call.1} parent=1 // pred_check_branch
      %221 = sbr.rel (%p218) target = $region137
    $region136: #{tpu_custom_call.1} parent=1 // pred_region
      %s236 = sand.u32 1, 7
      %p237 = scmp.eq.s32.totalorder %s236, 0
      %p238 = pneg %p237
      // Predicated region
      $region149: #{tpu_custom_call.1} parent=136 // pred_check
        _
      $region150: #{tpu_custom_call.1} parent=136 // pred_check_branch
        %240 = sbr.rel (%p237) target = $region152
      $region151: #{tpu_custom_call.1} parent=136 // pred_region
        %s241 = sand.u32 1, 7
        %s242 = ssub.s32 1, %s241
        %s243 = scalar_lea.vmem %s214, %s242
        %s244 = ssub.s32 1, %s241
        %s245 = scalar_lea.vmem %s215, %s244 [#allocation2]
        %s246 = sshllo.u32 0, %s241
        loop: start=0, step=1, limit=1
        $region153: #{tpu_custom_call.1} parent=151 // loop_pre_header
          _
        $region154: #{tpu_custom_call.1} parent=151 // loop_header
          %s248 = sphi 0, %s252
          %p249 = scmp.ge.s32.totalorder %s248, 1
          %s253 = sphi %s243, %s243
          %s254 = sphi %s245, %s245
        $region155: #{tpu_custom_call.1} parent=151 // loop_header_branch
          %251 = sbr.rel (%p249) target = $region159
        $region156: #{tpu_custom_call.1} parent=151 // loop_body
          %v255 = vld [vmem:[%s253] sm:%s246]
          %256 = vst [vmem:[%s254] sm:%s246] %v255
        $region157: #{tpu_custom_call.1} parent=151 // loop_footer
          %s252 = sadd.s32 1, %s248
        $region158: #{tpu_custom_call.1} parent=151 // loop_footer_branch
          %247 = sbr.rel target = $region154
        $region159: #{tpu_custom_call.1} parent=151 // loop_exit
          _
      $region152: #{tpu_custom_call.1} parent=136 // pred_fallthru
        _
    $region137: #{tpu_custom_call.1} parent=1 // pred_fallthru
      _
    // Predicated region
    $region138: #{tpu_custom_call.1} parent=1 // pred_check
      %p222 = pneg %p218
    $region139: #{tpu_custom_call.1} parent=1 // pred_check_branch
      %224 = sbr.rel (%p222) target = $region141
    $region140: #{tpu_custom_call.1} parent=1 // pred_region
      %s225 = sshllo.u32 0, 1
      loop: start=0, step=1, limit=1
      $region142: #{tpu_custom_call.1} parent=140 // loop_pre_header
        _
      $region143: #{tpu_custom_call.1} parent=140 // loop_header
        %s227 = sphi 0, %s231
        %p228 = scmp.ge.s32.totalorder %s227, 1
        %s232 = sphi %s214, %s214
        %s233 = sphi %s215, %s215
      $region144: #{tpu_custom_call.1} parent=140 // loop_header_branch
        %230 = sbr.rel (%p228) target = $region148
      $region145: #{tpu_custom_call.1} parent=140 // loop_body
        %v234 = vld [vmem:[%s232] sm:%s225]
        %235 = vst [vmem:[%s233] sm:%s225] %v234
      $region146: #{tpu_custom_call.1} parent=140 // loop_footer
        %s231 = sadd.s32 1, %s227
      $region147: #{tpu_custom_call.1} parent=140 // loop_footer_branch
        %226 = sbr.rel target = $region143
      $region148: #{tpu_custom_call.1} parent=140 // loop_exit
        _
    $region141: #{tpu_custom_call.1} parent=1 // pred_fallthru
      _
    // Predicated region
    $region160: #{tpu_custom_call.1} parent=1 // pred_check
      _
    $region161: #{tpu_custom_call.1} parent=1 // pred_check_branch
      %259 = sbr.rel (0) target = $region163
    $region162: #{tpu_custom_call.1} parent=1 // pred_region
      %260 = vsyncadd %s216, 16
    $region163: #{tpu_custom_call.1} parent=1 // pred_fallthru
      _
    %s261 = sld [smem:[#allocation5 + $0x5]]
    %s262 = scalar_lea.vmem %s1, %s261
    %s263 = scalar_lea.vmem [#allocation2], 5
    %s264 = scalar_lea.sflag [#allocation3], 5
    %p266 = scmp.lt.u32.totalorder 1, 8
    %p267 = pneg %p266
    // Predicated region
    $region164: #{tpu_custom_call.1} parent=1 // pred_check
      _
    $region165: #{tpu_custom_call.1} parent=1 // pred_check_branch
      %269 = sbr.rel (%p266) target = $region167
    $region166: #{tpu_custom_call.1} parent=1 // pred_region
      %s284 = sand.u32 1, 7
      %p285 = scmp.eq.s32.totalorder %s284, 0
      %p286 = pneg %p285
      // Predicated region
      $region179: #{tpu_custom_call.1} parent=166 // pred_check
        _
      $region180: #{tpu_custom_call.1} parent=166 // pred_check_branch
        %288 = sbr.rel (%p285) target = $region182
      $region181: #{tpu_custom_call.1} parent=166 // pred_region
        %s289 = sand.u32 1, 7
        %s290 = ssub.s32 1, %s289
        %s291 = scalar_lea.vmem %s262, %s290
        %s292 = ssub.s32 1, %s289
        %s293 = scalar_lea.vmem %s263, %s292 [#allocation2]
        %s294 = sshllo.u32 0, %s289
        loop: start=0, step=1, limit=1
        $region183: #{tpu_custom_call.1} parent=181 // loop_pre_header
          _
        $region184: #{tpu_custom_call.1} parent=181 // loop_header
          %s296 = sphi 0, %s300
          %p297 = scmp.ge.s32.totalorder %s296, 1
          %s301 = sphi %s291, %s291
          %s302 = sphi %s293, %s293
        $region185: #{tpu_custom_call.1} parent=181 // loop_header_branch
          %299 = sbr.rel (%p297) target = $region189
        $region186: #{tpu_custom_call.1} parent=181 // loop_body
          %v303 = vld [vmem:[%s301] sm:%s294]
          %304 = vst [vmem:[%s302] sm:%s294] %v303
        $region187: #{tpu_custom_call.1} parent=181 // loop_footer
          %s300 = sadd.s32 1, %s296
        $region188: #{tpu_custom_call.1} parent=181 // loop_footer_branch
          %295 = sbr.rel target = $region184
        $region189: #{tpu_custom_call.1} parent=181 // loop_exit
          _
      $region182: #{tpu_custom_call.1} parent=166 // pred_fallthru
        _
    $region167: #{tpu_custom_call.1} parent=1 // pred_fallthru
      _
    // Predicated region
    $region168: #{tpu_custom_call.1} parent=1 // pred_check
      %p270 = pneg %p266
    $region169: #{tpu_custom_call.1} parent=1 // pred_check_branch
      %272 = sbr.rel (%p270) target = $region171
    $region170: #{tpu_custom_call.1} parent=1 // pred_region
      %s273 = sshllo.u32 0, 1
      loop: start=0, step=1, limit=1
      $region172: #{tpu_custom_call.1} parent=170 // loop_pre_header
        _
      $region173: #{tpu_custom_call.1} parent=170 // loop_header
        %s275 = sphi 0, %s279
        %p276 = scmp.ge.s32.totalorder %s275, 1
        %s280 = sphi %s262, %s262
        %s281 = sphi %s263, %s263
      $region174: #{tpu_custom_call.1} parent=170 // loop_header_branch
        %278 = sbr.rel (%p276) target = $region178
      $region175: #{tpu_custom_call.1} parent=170 // loop_body
        %v282 = vld [vmem:[%s280] sm:%s273]
        %283 = vst [vmem:[%s281] sm:%s273] %v282
      $region176: #{tpu_custom_call.1} parent=170 // loop_footer
        %s279 = sadd.s32 1, %s275
      $region177: #{tpu_custom_call.1} parent=170 // loop_footer_branch
        %274 = sbr.rel target = $region173
      $region178: #{tpu_custom_call.1} parent=170 // loop_exit
        _
    $region171: #{tpu_custom_call.1} parent=1 // pred_fallthru
      _
    // Predicated region
    $region190: #{tpu_custom_call.1} parent=1 // pred_check
      _
    $region191: #{tpu_custom_call.1} parent=1 // pred_check_branch
      %307 = sbr.rel (0) target = $region193
    $region192: #{tpu_custom_call.1} parent=1 // pred_region
      %308 = vsyncadd %s264, 16
    $region193: #{tpu_custom_call.1} parent=1 // pred_fallthru
      _
    %s309 = sld [smem:[#allocation5 + $0x6]]
    %s310 = scalar_lea.vmem %s1, %s309
    %s311 = scalar_lea.vmem [#allocation2], 6
    %s312 = scalar_lea.sflag [#allocation3], 6
    %p314 = scmp.lt.u32.totalorder 1, 8
    %p315 = pneg %p314
    // Predicated region
    $region194: #{tpu_custom_call.1} parent=1 // pred_check
      _
    $region195: #{tpu_custom_call.1} parent=1 // pred_check_branch
      %317 = sbr.rel (%p314) target = $region197
    $region196: #{tpu_custom_call.1} parent=1 // pred_region
      %s332 = sand.u32 1, 7
      %p333 = scmp.eq.s32.totalorder %s332, 0
      %p334 = pneg %p333
      // Predicated region
      $region209: #{tpu_custom_call.1} parent=196 // pred_check
        _
      $region210: #{tpu_custom_call.1} parent=196 // pred_check_branch
        %336 = sbr.rel (%p333) target = $region212
      $region211: #{tpu_custom_call.1} parent=196 // pred_region
        %s337 = sand.u32 1, 7
        %s338 = ssub.s32 1, %s337
        %s339 = scalar_lea.vmem %s310, %s338
        %s340 = ssub.s32 1, %s337
        %s341 = scalar_lea.vmem %s311, %s340 [#allocation2]
        %s342 = sshllo.u32 0, %s337
        loop: start=0, step=1, limit=1
        $region213: #{tpu_custom_call.1} parent=211 // loop_pre_header
          _
        $region214: #{tpu_custom_call.1} parent=211 // loop_header
          %s344 = sphi 0, %s348
          %p345 = scmp.ge.s32.totalorder %s344, 1
          %s349 = sphi %s339, %s339
          %s350 = sphi %s341, %s341
        $region215: #{tpu_custom_call.1} parent=211 // loop_header_branch
          %347 = sbr.rel (%p345) target = $region219
        $region216: #{tpu_custom_call.1} parent=211 // loop_body
          %v351 = vld [vmem:[%s349] sm:%s342]
          %352 = vst [vmem:[%s350] sm:%s342] %v351
        $region217: #{tpu_custom_call.1} parent=211 // loop_footer
          %s348 = sadd.s32 1, %s344
        $region218: #{tpu_custom_call.1} parent=211 // loop_footer_branch
          %343 = sbr.rel target = $region214
        $region219: #{tpu_custom_call.1} parent=211 // loop_exit
          _
      $region212: #{tpu_custom_call.1} parent=196 // pred_fallthru
        _
    $region197: #{tpu_custom_call.1} parent=1 // pred_fallthru
      _
    // Predicated region
    $region198: #{tpu_custom_call.1} parent=1 // pred_check
      %p318 = pneg %p314
    $region199: #{tpu_custom_call.1} parent=1 // pred_check_branch
      %320 = sbr.rel (%p318) target = $region201
    $region200: #{tpu_custom_call.1} parent=1 // pred_region
      %s321 = sshllo.u32 0, 1
      loop: start=0, step=1, limit=1
      $region202: #{tpu_custom_call.1} parent=200 // loop_pre_header
        _
      $region203: #{tpu_custom_call.1} parent=200 // loop_header
        %s323 = sphi 0, %s327
        %p324 = scmp.ge.s32.totalorder %s323, 1
        %s328 = sphi %s310, %s310
        %s329 = sphi %s311, %s311
      $region204: #{tpu_custom_call.1} parent=200 // loop_header_branch
        %326 = sbr.rel (%p324) target = $region208
      $region205: #{tpu_custom_call.1} parent=200 // loop_body
        %v330 = vld [vmem:[%s328] sm:%s321]
        %331 = vst [vmem:[%s329] sm:%s321] %v330
      $region206: #{tpu_custom_call.1} parent=200 // loop_footer
        %s327 = sadd.s32 1, %s323
      $region207: #{tpu_custom_call.1} parent=200 // loop_footer_branch
        %322 = sbr.rel target = $region203
      $region208: #{tpu_custom_call.1} parent=200 // loop_exit
        _
    $region201: #{tpu_custom_call.1} parent=1 // pred_fallthru
      _
    // Predicated region
    $region220: #{tpu_custom_call.1} parent=1 // pred_check
      _
    $region221: #{tpu_custom_call.1} parent=1 // pred_check_branch
      %355 = sbr.rel (0) target = $region223
    $region222: #{tpu_custom_call.1} parent=1 // pred_region
      %356 = vsyncadd %s312, 16
    $region223: #{tpu_custom_call.1} parent=1 // pred_fallthru
      _
    %s357 = sld [smem:[#allocation5 + $0x7]]
    %s358 = scalar_lea.vmem %s1, %s357
    %s359 = scalar_lea.vmem [#allocation2], 7
    %s360 = scalar_lea.sflag [#allocation3], 7
    %p362 = scmp.lt.u32.totalorder 1, 8
    %p363 = pneg %p362
    // Predicated region
    $region224: #{tpu_custom_call.1} parent=1 // pred_check
      _
    $region225: #{tpu_custom_call.1} parent=1 // pred_check_branch
      %365 = sbr.rel (%p362) target = $region227
    $region226: #{tpu_custom_call.1} parent=1 // pred_region
      %s380 = sand.u32 1, 7
      %p381 = scmp.eq.s32.totalorder %s380, 0
      %p382 = pneg %p381
      // Predicated region
      $region239: #{tpu_custom_call.1} parent=226 // pred_check
        _
      $region240: #{tpu_custom_call.1} parent=226 // pred_check_branch
        %384 = sbr.rel (%p381) target = $region242
      $region241: #{tpu_custom_call.1} parent=226 // pred_region
        %s385 = sand.u32 1, 7
        %s386 = ssub.s32 1, %s385
        %s387 = scalar_lea.vmem %s358, %s386
        %s388 = ssub.s32 1, %s385
        %s389 = scalar_lea.vmem %s359, %s388 [#allocation2]
        %s390 = sshllo.u32 0, %s385
        loop: start=0, step=1, limit=1
        $region243: #{tpu_custom_call.1} parent=241 // loop_pre_header
          _
        $region244: #{tpu_custom_call.1} parent=241 // loop_header
          %s392 = sphi 0, %s396
          %p393 = scmp.ge.s32.totalorder %s392, 1
          %s397 = sphi %s387, %s387
          %s398 = sphi %s389, %s389
        $region245: #{tpu_custom_call.1} parent=241 // loop_header_branch
          %395 = sbr.rel (%p393) target = $region249
        $region246: #{tpu_custom_call.1} parent=241 // loop_body
          %v399 = vld [vmem:[%s397] sm:%s390]
          %400 = vst [vmem:[%s398] sm:%s390] %v399
        $region247: #{tpu_custom_call.1} parent=241 // loop_footer
          %s396 = sadd.s32 1, %s392
        $region248: #{tpu_custom_call.1} parent=241 // loop_footer_branch
          %391 = sbr.rel target = $region244
        $region249: #{tpu_custom_call.1} parent=241 // loop_exit
          _
      $region242: #{tpu_custom_call.1} parent=226 // pred_fallthru
        _
    $region227: #{tpu_custom_call.1} parent=1 // pred_fallthru
      _
    // Predicated region
    $region228: #{tpu_custom_call.1} parent=1 // pred_check
      %p366 = pneg %p362
    $region229: #{tpu_custom_call.1} parent=1 // pred_check_branch
      %368 = sbr.rel (%p366) target = $region231
    $region230: #{tpu_custom_call.1} parent=1 // pred_region
      %s369 = sshllo.u32 0, 1
      loop: start=0, step=1, limit=1
      $region232: #{tpu_custom_call.1} parent=230 // loop_pre_header
        _
      $region233: #{tpu_custom_call.1} parent=230 // loop_header
        %s371 = sphi 0, %s375
        %p372 = scmp.ge.s32.totalorder %s371, 1
        %s376 = sphi %s358, %s358
        %s377 = sphi %s359, %s359
      $region234: #{tpu_custom_call.1} parent=230 // loop_header_branch
        %374 = sbr.rel (%p372) target = $region238
      $region235: #{tpu_custom_call.1} parent=230 // loop_body
        %v378 = vld [vmem:[%s376] sm:%s369]
        %379 = vst [vmem:[%s377] sm:%s369] %v378
      $region236: #{tpu_custom_call.1} parent=230 // loop_footer
        %s375 = sadd.s32 1, %s371
      $region237: #{tpu_custom_call.1} parent=230 // loop_footer_branch
        %370 = sbr.rel target = $region233
      $region238: #{tpu_custom_call.1} parent=230 // loop_exit
        _
    $region231: #{tpu_custom_call.1} parent=1 // pred_fallthru
      _
    // Predicated region
    $region250: #{tpu_custom_call.1} parent=1 // pred_check
      _
    $region251: #{tpu_custom_call.1} parent=1 // pred_check_branch
      %403 = sbr.rel (0) target = $region253
    $region252: #{tpu_custom_call.1} parent=1 // pred_region
      %404 = vsyncadd %s360, 16
    $region253: #{tpu_custom_call.1} parent=1 // pred_fallthru
      _
    %s405 = sld [smem:[#allocation5 + $0x8]]
    %s406 = scalar_lea.vmem %s1, %s405
    %s407 = scalar_lea.vmem [#allocation2], 8
    %s408 = scalar_lea.sflag [#allocation3], 8
    %p410 = scmp.lt.u32.totalorder 1, 8
    %p411 = pneg %p410
    // Predicated region
    $region254: #{tpu_custom_call.1} parent=1 // pred_check
      _
    $region255: #{tpu_custom_call.1} parent=1 // pred_check_branch
      %413 = sbr.rel (%p410) target = $region257
    $region256: #{tpu_custom_call.1} parent=1 // pred_region
      %s428 = sand.u32 1, 7
      %p429 = scmp.eq.s32.totalorder %s428, 0
      %p430 = pneg %p429
      // Predicated region
      $region269: #{tpu_custom_call.1} parent=256 // pred_check
        _
      $region270: #{tpu_custom_call.1} parent=256 // pred_check_branch
        %432 = sbr.rel (%p429) target = $region272
      $region271: #{tpu_custom_call.1} parent=256 // pred_region
        %s433 = sand.u32 1, 7
        %s434 = ssub.s32 1, %s433
        %s435 = scalar_lea.vmem %s406, %s434
        %s436 = ssub.s32 1, %s433
        %s437 = scalar_lea.vmem %s407, %s436 [#allocation2]
        %s438 = sshllo.u32 0, %s433
        loop: start=0, step=1, limit=1
        $region273: #{tpu_custom_call.1} parent=271 // loop_pre_header
          _
        $region274: #{tpu_custom_call.1} parent=271 // loop_header
          %s440 = sphi 0, %s444
          %p441 = scmp.ge.s32.totalorder %s440, 1
          %s445 = sphi %s435, %s435
          %s446 = sphi %s437, %s437
        $region275: #{tpu_custom_call.1} parent=271 // loop_header_branch
          %443 = sbr.rel (%p441) target = $region279
        $region276: #{tpu_custom_call.1} parent=271 // loop_body
          %v447 = vld [vmem:[%s445] sm:%s438]
          %448 = vst [vmem:[%s446] sm:%s438] %v447
        $region277: #{tpu_custom_call.1} parent=271 // loop_footer
          %s444 = sadd.s32 1, %s440
        $region278: #{tpu_custom_call.1} parent=271 // loop_footer_branch
          %439 = sbr.rel target = $region274
        $region279: #{tpu_custom_call.1} parent=271 // loop_exit
          _
      $region272: #{tpu_custom_call.1} parent=256 // pred_fallthru
        _
    $region257: #{tpu_custom_call.1} parent=1 // pred_fallthru
      _
    // Predicated region
    $region258: #{tpu_custom_call.1} parent=1 // pred_check
      %p414 = pneg %p410
    $region259: #{tpu_custom_call.1} parent=1 // pred_check_branch
      %416 = sbr.rel (%p414) target = $region261
    $region260: #{tpu_custom_call.1} parent=1 // pred_region
      %s417 = sshllo.u32 0, 1
      loop: start=0, step=1, limit=1
      $region262: #{tpu_custom_call.1} parent=260 // loop_pre_header
        _
      $region263: #{tpu_custom_call.1} parent=260 // loop_header
        %s419 = sphi 0, %s423
        %p420 = scmp.ge.s32.totalorder %s419, 1
        %s424 = sphi %s406, %s406
        %s425 = sphi %s407, %s407
      $region264: #{tpu_custom_call.1} parent=260 // loop_header_branch
        %422 = sbr.rel (%p420) target = $region268
      $region265: #{tpu_custom_call.1} parent=260 // loop_body
        %v426 = vld [vmem:[%s424] sm:%s417]
        %427 = vst [vmem:[%s425] sm:%s417] %v426
      $region266: #{tpu_custom_call.1} parent=260 // loop_footer
        %s423 = sadd.s32 1, %s419
      $region267: #{tpu_custom_call.1} parent=260 // loop_footer_branch
        %418 = sbr.rel target = $region263
      $region268: #{tpu_custom_call.1} parent=260 // loop_exit
        _
    $region261: #{tpu_custom_call.1} parent=1 // pred_fallthru
      _
    // Predicated region
    $region280: #{tpu_custom_call.1} parent=1 // pred_check
      _
    $region281: #{tpu_custom_call.1} parent=1 // pred_check_branch
      %451 = sbr.rel (0) target = $region283
    $region282: #{tpu_custom_call.1} parent=1 // pred_region
      %452 = vsyncadd %s408, 16
    $region283: #{tpu_custom_call.1} parent=1 // pred_fallthru
      _
    %s453 = sld [smem:[#allocation5 + $0x9]]
    %s454 = scalar_lea.vmem %s1, %s453
    %s455 = scalar_lea.vmem [#allocation2], 9
    %s456 = scalar_lea.sflag [#allocation3], 9
    %p458 = scmp.lt.u32.totalorder 1, 8
    %p459 = pneg %p458
    // Predicated region
    $region284: #{tpu_custom_call.1} parent=1 // pred_check
      _
    $region285: #{tpu_custom_call.1} parent=1 // pred_check_branch
      %461 = sbr.rel (%p458) target = $region287
    $region286: #{tpu_custom_call.1} parent=1 // pred_region
      %s476 = sand.u32 1, 7
      %p477 = scmp.eq.s32.totalorder %s476, 0
      %p478 = pneg %p477
      // Predicated region
      $region299: #{tpu_custom_call.1} parent=286 // pred_check
        _
      $region300: #{tpu_custom_call.1} parent=286 // pred_check_branch
        %480 = sbr.rel (%p477) target = $region302
      $region301: #{tpu_custom_call.1} parent=286 // pred_region
        %s481 = sand.u32 1, 7
        %s482 = ssub.s32 1, %s481
        %s483 = scalar_lea.vmem %s454, %s482
        %s484 = ssub.s32 1, %s481
        %s485 = scalar_lea.vmem %s455, %s484 [#allocation2]
        %s486 = sshllo.u32 0, %s481
        loop: start=0, step=1, limit=1
        $region303: #{tpu_custom_call.1} parent=301 // loop_pre_header
          _
        $region304: #{tpu_custom_call.1} parent=301 // loop_header
          %s488 = sphi 0, %s492
          %p489 = scmp.ge.s32.totalorder %s488, 1
          %s493 = sphi %s483, %s483
          %s494 = sphi %s485, %s485
        $region305: #{tpu_custom_call.1} parent=301 // loop_header_branch
          %491 = sbr.rel (%p489) target = $region309
        $region306: #{tpu_custom_call.1} parent=301 // loop_body
          %v495 = vld [vmem:[%s493] sm:%s486]
          %496 = vst [vmem:[%s494] sm:%s486] %v495
        $region307: #{tpu_custom_call.1} parent=301 // loop_footer
          %s492 = sadd.s32 1, %s488
        $region308: #{tpu_custom_call.1} parent=301 // loop_footer_branch
          %487 = sbr.rel target = $region304
        $region309: #{tpu_custom_call.1} parent=301 // loop_exit
          _
      $region302: #{tpu_custom_call.1} parent=286 // pred_fallthru
        _
    $region287: #{tpu_custom_call.1} parent=1 // pred_fallthru
      _
    // Predicated region
    $region288: #{tpu_custom_call.1} parent=1 // pred_check
      %p462 = pneg %p458
    $region289: #{tpu_custom_call.1} parent=1 // pred_check_branch
      %464 = sbr.rel (%p462) target = $region291
    $region290: #{tpu_custom_call.1} parent=1 // pred_region
      %s465 = sshllo.u32 0, 1
      loop: start=0, step=1, limit=1
      $region292: #{tpu_custom_call.1} parent=290 // loop_pre_header
        _
      $region293: #{tpu_custom_call.1} parent=290 // loop_header
        %s467 = sphi 0, %s471
        %p468 = scmp.ge.s32.totalorder %s467, 1
        %s472 = sphi %s454, %s454
        %s473 = sphi %s455, %s455
      $region294: #{tpu_custom_call.1} parent=290 // loop_header_branch
        %470 = sbr.rel (%p468) target = $region298
      $region295: #{tpu_custom_call.1} parent=290 // loop_body
        %v474 = vld [vmem:[%s472] sm:%s465]
        %475 = vst [vmem:[%s473] sm:%s465] %v474
      $region296: #{tpu_custom_call.1} parent=290 // loop_footer
        %s471 = sadd.s32 1, %s467
      $region297: #{tpu_custom_call.1} parent=290 // loop_footer_branch
        %466 = sbr.rel target = $region293
      $region298: #{tpu_custom_call.1} parent=290 // loop_exit
        _
    $region291: #{tpu_custom_call.1} parent=1 // pred_fallthru
      _
    // Predicated region
    $region310: #{tpu_custom_call.1} parent=1 // pred_check
      _
    $region311: #{tpu_custom_call.1} parent=1 // pred_check_branch
      %499 = sbr.rel (0) target = $region313
    $region312: #{tpu_custom_call.1} parent=1 // pred_region
      %500 = vsyncadd %s456, 16
    $region313: #{tpu_custom_call.1} parent=1 // pred_fallthru
      _
    %s501 = sld [smem:[#allocation5 + $0xa]]
    %s502 = scalar_lea.vmem %s1, %s501
    %s503 = scalar_lea.vmem [#allocation2], 10
    %s504 = scalar_lea.sflag [#allocation3], 10
    %p506 = scmp.lt.u32.totalorder 1, 8
    %p507 = pneg %p506
    // Predicated region
    $region314: #{tpu_custom_call.1} parent=1 // pred_check
      _
    $region315: #{tpu_custom_call.1} parent=1 // pred_check_branch
      %509 = sbr.rel (%p506) target = $region317
    $region316: #{tpu_custom_call.1} parent=1 // pred_region
      %s524 = sand.u32 1, 7
      %p525 = scmp.eq.s32.totalorder %s524, 0
      %p526 = pneg %p525
      // Predicated region
      $region329: #{tpu_custom_call.1} parent=316 // pred_check
        _
      $region330: #{tpu_custom_call.1} parent=316 // pred_check_branch
        %528 = sbr.rel (%p525) target = $region332
      $region331: #{tpu_custom_call.1} parent=316 // pred_region
        %s529 = sand.u32 1, 7
        %s530 = ssub.s32 1, %s529
        %s531 = scalar_lea.vmem %s502, %s530
        %s532 = ssub.s32 1, %s529
        %s533 = scalar_lea.vmem %s503, %s532 [#allocation2]
        %s534 = sshllo.u32 0, %s529
        loop: start=0, step=1, limit=1
        $region333: #{tpu_custom_call.1} parent=331 // loop_pre_header
          _
        $region334: #{tpu_custom_call.1} parent=331 // loop_header
          %s536 = sphi 0, %s540
          %p537 = scmp.ge.s32.totalorder %s536, 1
          %s541 = sphi %s531, %s531
          %s542 = sphi %s533, %s533
        $region335: #{tpu_custom_call.1} parent=331 // loop_header_branch
          %539 = sbr.rel (%p537) target = $region339
        $region336: #{tpu_custom_call.1} parent=331 // loop_body
          %v543 = vld [vmem:[%s541] sm:%s534]
          %544 = vst [vmem:[%s542] sm:%s534] %v543
        $region337: #{tpu_custom_call.1} parent=331 // loop_footer
          %s540 = sadd.s32 1, %s536
        $region338: #{tpu_custom_call.1} parent=331 // loop_footer_branch
          %535 = sbr.rel target = $region334
        $region339: #{tpu_custom_call.1} parent=331 // loop_exit
          _
      $region332: #{tpu_custom_call.1} parent=316 // pred_fallthru
        _
    $region317: #{tpu_custom_call.1} parent=1 // pred_fallthru
      _
    // Predicated region
    $region318: #{tpu_custom_call.1} parent=1 // pred_check
      %p510 = pneg %p506
    $region319: #{tpu_custom_call.1} parent=1 // pred_check_branch
      %512 = sbr.rel (%p510) target = $region321
    $region320: #{tpu_custom_call.1} parent=1 // pred_region
      %s513 = sshllo.u32 0, 1
      loop: start=0, step=1, limit=1
      $region322: #{tpu_custom_call.1} parent=320 // loop_pre_header
        _
      $region323: #{tpu_custom_call.1} parent=320 // loop_header
        %s515 = sphi 0, %s519
        %p516 = scmp.ge.s32.totalorder %s515, 1
        %s520 = sphi %s502, %s502
        %s521 = sphi %s503, %s503
      $region324: #{tpu_custom_call.1} parent=320 // loop_header_branch
        %518 = sbr.rel (%p516) target = $region328
      $region325: #{tpu_custom_call.1} parent=320 // loop_body
        %v522 = vld [vmem:[%s520] sm:%s513]
        %523 = vst [vmem:[%s521] sm:%s513] %v522
      $region326: #{tpu_custom_call.1} parent=320 // loop_footer
        %s519 = sadd.s32 1, %s515
      $region327: #{tpu_custom_call.1} parent=320 // loop_footer_branch
        %514 = sbr.rel target = $region323
      $region328: #{tpu_custom_call.1} parent=320 // loop_exit
        _
    $region321: #{tpu_custom_call.1} parent=1 // pred_fallthru
      _
    // Predicated region
    $region340: #{tpu_custom_call.1} parent=1 // pred_check
      _
    $region341: #{tpu_custom_call.1} parent=1 // pred_check_branch
      %547 = sbr.rel (0) target = $region343
    $region342: #{tpu_custom_call.1} parent=1 // pred_region
      %548 = vsyncadd %s504, 16
    $region343: #{tpu_custom_call.1} parent=1 // pred_fallthru
      _
    %s549 = sld [smem:[#allocation5 + $0xb]]
    %s550 = scalar_lea.vmem %s1, %s549
    %s551 = scalar_lea.vmem [#allocation2], 11
    %s552 = scalar_lea.sflag [#allocation3], 11
    %p554 = scmp.lt.u32.totalorder 1, 8
    %p555 = pneg %p554
    // Predicated region
    $region344: #{tpu_custom_call.1} parent=1 // pred_check
      _
    $region345: #{tpu_custom_call.1} parent=1 // pred_check_branch
      %557 = sbr.rel (%p554) target = $region347
    $region346: #{tpu_custom_call.1} parent=1 // pred_region
      %s572 = sand.u32 1, 7
      %p573 = scmp.eq.s32.totalorder %s572, 0
      %p574 = pneg %p573
      // Predicated region
      $region359: #{tpu_custom_call.1} parent=346 // pred_check
        _
      $region360: #{tpu_custom_call.1} parent=346 // pred_check_branch
        %576 = sbr.rel (%p573) target = $region362
      $region361: #{tpu_custom_call.1} parent=346 // pred_region
        %s577 = sand.u32 1, 7
        %s578 = ssub.s32 1, %s577
        %s579 = scalar_lea.vmem %s550, %s578
        %s580 = ssub.s32 1, %s577
        %s581 = scalar_lea.vmem %s551, %s580 [#allocation2]
        %s582 = sshllo.u32 0, %s577
        loop: start=0, step=1, limit=1
        $region363: #{tpu_custom_call.1} parent=361 // loop_pre_header
          _
        $region364: #{tpu_custom_call.1} parent=361 // loop_header
          %s584 = sphi 0, %s588
          %p585 = scmp.ge.s32.totalorder %s584, 1
          %s589 = sphi %s579, %s579
          %s590 = sphi %s581, %s581
        $region365: #{tpu_custom_call.1} parent=361 // loop_header_branch
          %587 = sbr.rel (%p585) target = $region369
        $region366: #{tpu_custom_call.1} parent=361 // loop_body
          %v591 = vld [vmem:[%s589] sm:%s582]
          %592 = vst [vmem:[%s590] sm:%s582] %v591
        $region367: #{tpu_custom_call.1} parent=361 // loop_footer
          %s588 = sadd.s32 1, %s584
        $region368: #{tpu_custom_call.1} parent=361 // loop_footer_branch
          %583 = sbr.rel target = $region364
        $region369: #{tpu_custom_call.1} parent=361 // loop_exit
          _
      $region362: #{tpu_custom_call.1} parent=346 // pred_fallthru
        _
    $region347: #{tpu_custom_call.1} parent=1 // pred_fallthru
      _
    // Predicated region
    $region348: #{tpu_custom_call.1} parent=1 // pred_check
      %p558 = pneg %p554
    $region349: #{tpu_custom_call.1} parent=1 // pred_check_branch
      %560 = sbr.rel (%p558) target = $region351
    $region350: #{tpu_custom_call.1} parent=1 // pred_region
      %s561 = sshllo.u32 0, 1
      loop: start=0, step=1, limit=1
      $region352: #{tpu_custom_call.1} parent=350 // loop_pre_header
        _
      $region353: #{tpu_custom_call.1} parent=350 // loop_header
        %s563 = sphi 0, %s567
        %p564 = scmp.ge.s32.totalorder %s563, 1
        %s568 = sphi %s550, %s550
        %s569 = sphi %s551, %s551
      $region354: #{tpu_custom_call.1} parent=350 // loop_header_branch
        %566 = sbr.rel (%p564) target = $region358
      $region355: #{tpu_custom_call.1} parent=350 // loop_body
        %v570 = vld [vmem:[%s568] sm:%s561]
        %571 = vst [vmem:[%s569] sm:%s561] %v570
      $region356: #{tpu_custom_call.1} parent=350 // loop_footer
        %s567 = sadd.s32 1, %s563
      $region357: #{tpu_custom_call.1} parent=350 // loop_footer_branch
        %562 = sbr.rel target = $region353
      $region358: #{tpu_custom_call.1} parent=350 // loop_exit
        _
    $region351: #{tpu_custom_call.1} parent=1 // pred_fallthru
      _
    // Predicated region
    $region370: #{tpu_custom_call.1} parent=1 // pred_check
      _
    $region371: #{tpu_custom_call.1} parent=1 // pred_check_branch
      %595 = sbr.rel (0) target = $region373
    $region372: #{tpu_custom_call.1} parent=1 // pred_region
      %596 = vsyncadd %s552, 16
    $region373: #{tpu_custom_call.1} parent=1 // pred_fallthru
      _
    %s597 = sld [smem:[#allocation5 + $0xc]]
    %s598 = scalar_lea.vmem %s1, %s597
    %s599 = scalar_lea.vmem [#allocation2], 12
    %s600 = scalar_lea.sflag [#allocation3], 12
    %p602 = scmp.lt.u32.totalorder 1, 8
    %p603 = pneg %p602
    // Predicated region
    $region374: #{tpu_custom_call.1} parent=1 // pred_check
      _
    $region375: #{tpu_custom_call.1} parent=1 // pred_check_branch
      %605 = sbr.rel (%p602) target = $region377
    $region376: #{tpu_custom_call.1} parent=1 // pred_region
      %s620 = sand.u32 1, 7
      %p621 = scmp.eq.s32.totalorder %s620, 0
      %p622 = pneg %p621
      // Predicated region
      $region389: #{tpu_custom_call.1} parent=376 // pred_check
        _
      $region390: #{tpu_custom_call.1} parent=376 // pred_check_branch
        %624 = sbr.rel (%p621) target = $region392
      $region391: #{tpu_custom_call.1} parent=376 // pred_region
        %s625 = sand.u32 1, 7
        %s626 = ssub.s32 1, %s625
        %s627 = scalar_lea.vmem %s598, %s626
        %s628 = ssub.s32 1, %s625
        %s629 = scalar_lea.vmem %s599, %s628 [#allocation2]
        %s630 = sshllo.u32 0, %s625
        loop: start=0, step=1, limit=1
        $region393: #{tpu_custom_call.1} parent=391 // loop_pre_header
          _
        $region394: #{tpu_custom_call.1} parent=391 // loop_header
          %s632 = sphi 0, %s636
          %p633 = scmp.ge.s32.totalorder %s632, 1
          %s637 = sphi %s627, %s627
          %s638 = sphi %s629, %s629
        $region395: #{tpu_custom_call.1} parent=391 // loop_header_branch
          %635 = sbr.rel (%p633) target = $region399
        $region396: #{tpu_custom_call.1} parent=391 // loop_body
          %v639 = vld [vmem:[%s637] sm:%s630]
          %640 = vst [vmem:[%s638] sm:%s630] %v639
        $region397: #{tpu_custom_call.1} parent=391 // loop_footer
          %s636 = sadd.s32 1, %s632
        $region398: #{tpu_custom_call.1} parent=391 // loop_footer_branch
          %631 = sbr.rel target = $region394
        $region399: #{tpu_custom_call.1} parent=391 // loop_exit
          _
      $region392: #{tpu_custom_call.1} parent=376 // pred_fallthru
        _
    $region377: #{tpu_custom_call.1} parent=1 // pred_fallthru
      _
    // Predicated region
    $region378: #{tpu_custom_call.1} parent=1 // pred_check
      %p606 = pneg %p602
    $region379: #{tpu_custom_call.1} parent=1 // pred_check_branch
      %608 = sbr.rel (%p606) target = $region381
    $region380: #{tpu_custom_call.1} parent=1 // pred_region
      %s609 = sshllo.u32 0, 1
      loop: start=0, step=1, limit=1
      $region382: #{tpu_custom_call.1} parent=380 // loop_pre_header
        _
      $region383: #{tpu_custom_call.1} parent=380 // loop_header
        %s611 = sphi 0, %s615
        %p612 = scmp.ge.s32.totalorder %s611, 1
        %s616 = sphi %s598, %s598
        %s617 = sphi %s599, %s599
      $region384: #{tpu_custom_call.1} parent=380 // loop_header_branch
        %614 = sbr.rel (%p612) target = $region388
      $region385: #{tpu_custom_call.1} parent=380 // loop_body
        %v618 = vld [vmem:[%s616] sm:%s609]
        %619 = vst [vmem:[%s617] sm:%s609] %v618
      $region386: #{tpu_custom_call.1} parent=380 // loop_footer
        %s615 = sadd.s32 1, %s611
      $region387: #{tpu_custom_call.1} parent=380 // loop_footer_branch
        %610 = sbr.rel target = $region383
      $region388: #{tpu_custom_call.1} parent=380 // loop_exit
        _
    $region381: #{tpu_custom_call.1} parent=1 // pred_fallthru
      _
    // Predicated region
    $region400: #{tpu_custom_call.1} parent=1 // pred_check
      _
    $region401: #{tpu_custom_call.1} parent=1 // pred_check_branch
      %643 = sbr.rel (0) target = $region403
    $region402: #{tpu_custom_call.1} parent=1 // pred_region
      %644 = vsyncadd %s600, 16
    $region403: #{tpu_custom_call.1} parent=1 // pred_fallthru
      _
    %s645 = sld [smem:[#allocation5 + $0xd]]
    %s646 = scalar_lea.vmem %s1, %s645
    %s647 = scalar_lea.vmem [#allocation2], 13
    %s648 = scalar_lea.sflag [#allocation3], 13
    %p650 = scmp.lt.u32.totalorder 1, 8
    %p651 = pneg %p650
    // Predicated region
    $region404: #{tpu_custom_call.1} parent=1 // pred_check
      _
    $region405: #{tpu_custom_call.1} parent=1 // pred_check_branch
      %653 = sbr.rel (%p650) target = $region407
    $region406: #{tpu_custom_call.1} parent=1 // pred_region
      %s668 = sand.u32 1, 7
      %p669 = scmp.eq.s32.totalorder %s668, 0
      %p670 = pneg %p669
      // Predicated region
      $region419: #{tpu_custom_call.1} parent=406 // pred_check
        _
      $region420: #{tpu_custom_call.1} parent=406 // pred_check_branch
        %672 = sbr.rel (%p669) target = $region422
      $region421: #{tpu_custom_call.1} parent=406 // pred_region
        %s673 = sand.u32 1, 7
        %s674 = ssub.s32 1, %s673
        %s675 = scalar_lea.vmem %s646, %s674
        %s676 = ssub.s32 1, %s673
        %s677 = scalar_lea.vmem %s647, %s676 [#allocation2]
        %s678 = sshllo.u32 0, %s673
        loop: start=0, step=1, limit=1
        $region423: #{tpu_custom_call.1} parent=421 // loop_pre_header
          _
        $region424: #{tpu_custom_call.1} parent=421 // loop_header
          %s680 = sphi 0, %s684
          %p681 = scmp.ge.s32.totalorder %s680, 1
          %s685 = sphi %s675, %s675
          %s686 = sphi %s677, %s677
        $region425: #{tpu_custom_call.1} parent=421 // loop_header_branch
          %683 = sbr.rel (%p681) target = $region429
        $region426: #{tpu_custom_call.1} parent=421 // loop_body
          %v687 = vld [vmem:[%s685] sm:%s678]
          %688 = vst [vmem:[%s686] sm:%s678] %v687
        $region427: #{tpu_custom_call.1} parent=421 // loop_footer
          %s684 = sadd.s32 1, %s680
        $region428: #{tpu_custom_call.1} parent=421 // loop_footer_branch
          %679 = sbr.rel target = $region424
        $region429: #{tpu_custom_call.1} parent=421 // loop_exit
          _
      $region422: #{tpu_custom_call.1} parent=406 // pred_fallthru
        _
    $region407: #{tpu_custom_call.1} parent=1 // pred_fallthru
      _
    // Predicated region
    $region408: #{tpu_custom_call.1} parent=1 // pred_check
      %p654 = pneg %p650
    $region409: #{tpu_custom_call.1} parent=1 // pred_check_branch
      %656 = sbr.rel (%p654) target = $region411
    $region410: #{tpu_custom_call.1} parent=1 // pred_region
      %s657 = sshllo.u32 0, 1
      loop: start=0, step=1, limit=1
      $region412: #{tpu_custom_call.1} parent=410 // loop_pre_header
        _
      $region413: #{tpu_custom_call.1} parent=410 // loop_header
        %s659 = sphi 0, %s663
        %p660 = scmp.ge.s32.totalorder %s659, 1
        %s664 = sphi %s646, %s646
        %s665 = sphi %s647, %s647
      $region414: #{tpu_custom_call.1} parent=410 // loop_header_branch
        %662 = sbr.rel (%p660) target = $region418
      $region415: #{tpu_custom_call.1} parent=410 // loop_body
        %v666 = vld [vmem:[%s664] sm:%s657]
        %667 = vst [vmem:[%s665] sm:%s657] %v666
      $region416: #{tpu_custom_call.1} parent=410 // loop_footer
        %s663 = sadd.s32 1, %s659
      $region417: #{tpu_custom_call.1} parent=410 // loop_footer_branch
        %658 = sbr.rel target = $region413
      $region418: #{tpu_custom_call.1} parent=410 // loop_exit
        _
    $region411: #{tpu_custom_call.1} parent=1 // pred_fallthru
      _
    // Predicated region
    $region430: #{tpu_custom_call.1} parent=1 // pred_check
      _
    $region431: #{tpu_custom_call.1} parent=1 // pred_check_branch
      %691 = sbr.rel (0) target = $region433
    $region432: #{tpu_custom_call.1} parent=1 // pred_region
      %692 = vsyncadd %s648, 16
    $region433: #{tpu_custom_call.1} parent=1 // pred_fallthru
      _
    %s693 = sld [smem:[#allocation5 + $0xe]]
    %s694 = scalar_lea.vmem %s1, %s693
    %s695 = scalar_lea.vmem [#allocation2], 14
    %s696 = scalar_lea.sflag [#allocation3], 14
    %p698 = scmp.lt.u32.totalorder 1, 8
    %p699 = pneg %p698
    // Predicated region
    $region434: #{tpu_custom_call.1} parent=1 // pred_check
      _
    $region435: #{tpu_custom_call.1} parent=1 // pred_check_branch
      %701 = sbr.rel (%p698) target = $region437
    $region436: #{tpu_custom_call.1} parent=1 // pred_region
      %s716 = sand.u32 1, 7
      %p717 = scmp.eq.s32.totalorder %s716, 0
      %p718 = pneg %p717
      // Predicated region
      $region449: #{tpu_custom_call.1} parent=436 // pred_check
        _
      $region450: #{tpu_custom_call.1} parent=436 // pred_check_branch
        %720 = sbr.rel (%p717) target = $region452
      $region451: #{tpu_custom_call.1} parent=436 // pred_region
        %s721 = sand.u32 1, 7
        %s722 = ssub.s32 1, %s721
        %s723 = scalar_lea.vmem %s694, %s722
        %s724 = ssub.s32 1, %s721
        %s725 = scalar_lea.vmem %s695, %s724 [#allocation2]
        %s726 = sshllo.u32 0, %s721
        loop: start=0, step=1, limit=1
        $region453: #{tpu_custom_call.1} parent=451 // loop_pre_header
          _
        $region454: #{tpu_custom_call.1} parent=451 // loop_header
          %s728 = sphi 0, %s732
          %p729 = scmp.ge.s32.totalorder %s728, 1
          %s733 = sphi %s723, %s723
          %s734 = sphi %s725, %s725
        $region455: #{tpu_custom_call.1} parent=451 // loop_header_branch
          %731 = sbr.rel (%p729) target = $region459
        $region456: #{tpu_custom_call.1} parent=451 // loop_body
          %v735 = vld [vmem:[%s733] sm:%s726]
          %736 = vst [vmem:[%s734] sm:%s726] %v735
        $region457: #{tpu_custom_call.1} parent=451 // loop_footer
          %s732 = sadd.s32 1, %s728
        $region458: #{tpu_custom_call.1} parent=451 // loop_footer_branch
          %727 = sbr.rel target = $region454
        $region459: #{tpu_custom_call.1} parent=451 // loop_exit
          _
      $region452: #{tpu_custom_call.1} parent=436 // pred_fallthru
        _
    $region437: #{tpu_custom_call.1} parent=1 // pred_fallthru
      _
    // Predicated region
    $region438: #{tpu_custom_call.1} parent=1 // pred_check
      %p702 = pneg %p698
    $region439: #{tpu_custom_call.1} parent=1 // pred_check_branch
      %704 = sbr.rel (%p702) target = $region441
    $region440: #{tpu_custom_call.1} parent=1 // pred_region
      %s705 = sshllo.u32 0, 1
      loop: start=0, step=1, limit=1
      $region442: #{tpu_custom_call.1} parent=440 // loop_pre_header
        _
      $region443: #{tpu_custom_call.1} parent=440 // loop_header
        %s707 = sphi 0, %s711
        %p708 = scmp.ge.s32.totalorder %s707, 1
        %s712 = sphi %s694, %s694
        %s713 = sphi %s695, %s695
      $region444: #{tpu_custom_call.1} parent=440 // loop_header_branch
        %710 = sbr.rel (%p708) target = $region448
      $region445: #{tpu_custom_call.1} parent=440 // loop_body
        %v714 = vld [vmem:[%s712] sm:%s705]
        %715 = vst [vmem:[%s713] sm:%s705] %v714
      $region446: #{tpu_custom_call.1} parent=440 // loop_footer
        %s711 = sadd.s32 1, %s707
      $region447: #{tpu_custom_call.1} parent=440 // loop_footer_branch
        %706 = sbr.rel target = $region443
      $region448: #{tpu_custom_call.1} parent=440 // loop_exit
        _
    $region441: #{tpu_custom_call.1} parent=1 // pred_fallthru
      _
    // Predicated region
    $region460: #{tpu_custom_call.1} parent=1 // pred_check
      _
    $region461: #{tpu_custom_call.1} parent=1 // pred_check_branch
      %739 = sbr.rel (0) target = $region463
    $region462: #{tpu_custom_call.1} parent=1 // pred_region
      %740 = vsyncadd %s696, 16
    $region463: #{tpu_custom_call.1} parent=1 // pred_fallthru
      _
    %s741 = sld [smem:[#allocation5 + $0xf]]
    %s742 = scalar_lea.vmem %s1, %s741
    %s743 = scalar_lea.vmem [#allocation2], 15
    %s744 = scalar_lea.sflag [#allocation3], 15
    %p746 = scmp.lt.u32.totalorder 1, 8
    %p747 = pneg %p746
    // Predicated region
    $region464: #{tpu_custom_call.1} parent=1 // pred_check
      _
    $region465: #{tpu_custom_call.1} parent=1 // pred_check_branch
      %749 = sbr.rel (%p746) target = $region467
    $region466: #{tpu_custom_call.1} parent=1 // pred_region
      %s764 = sand.u32 1, 7
      %p765 = scmp.eq.s32.totalorder %s764, 0
      %p766 = pneg %p765
      // Predicated region
      $region479: #{tpu_custom_call.1} parent=466 // pred_check
        _
      $region480: #{tpu_custom_call.1} parent=466 // pred_check_branch
        %768 = sbr.rel (%p765) target = $region482
      $region481: #{tpu_custom_call.1} parent=466 // pred_region
        %s769 = sand.u32 1, 7
        %s770 = ssub.s32 1, %s769
        %s771 = scalar_lea.vmem %s742, %s770
        %s772 = ssub.s32 1, %s769
        %s773 = scalar_lea.vmem %s743, %s772 [#allocation2]
        %s774 = sshllo.u32 0, %s769
        loop: start=0, step=1, limit=1
        $region483: #{tpu_custom_call.1} parent=481 // loop_pre_header
          _
        $region484: #{tpu_custom_call.1} parent=481 // loop_header
          %s776 = sphi 0, %s780
          %p777 = scmp.ge.s32.totalorder %s776, 1
          %s781 = sphi %s771, %s771
          %s782 = sphi %s773, %s773
        $region485: #{tpu_custom_call.1} parent=481 // loop_header_branch
          %779 = sbr.rel (%p777) target = $region489
        $region486: #{tpu_custom_call.1} parent=481 // loop_body
          %v783 = vld [vmem:[%s781] sm:%s774]
          %784 = vst [vmem:[%s782] sm:%s774] %v783
        $region487: #{tpu_custom_call.1} parent=481 // loop_footer
          %s780 = sadd.s32 1, %s776
        $region488: #{tpu_custom_call.1} parent=481 // loop_footer_branch
          %775 = sbr.rel target = $region484
        $region489: #{tpu_custom_call.1} parent=481 // loop_exit
          _
      $region482: #{tpu_custom_call.1} parent=466 // pred_fallthru
        _
    $region467: #{tpu_custom_call.1} parent=1 // pred_fallthru
      _
    // Predicated region
    $region468: #{tpu_custom_call.1} parent=1 // pred_check
      %p750 = pneg %p746
    $region469: #{tpu_custom_call.1} parent=1 // pred_check_branch
      %752 = sbr.rel (%p750) target = $region471
    $region470: #{tpu_custom_call.1} parent=1 // pred_region
      %s753 = sshllo.u32 0, 1
      loop: start=0, step=1, limit=1
      $region472: #{tpu_custom_call.1} parent=470 // loop_pre_header
        _
      $region473: #{tpu_custom_call.1} parent=470 // loop_header
        %s755 = sphi 0, %s759
        %p756 = scmp.ge.s32.totalorder %s755, 1
        %s760 = sphi %s742, %s742
        %s761 = sphi %s743, %s743
      $region474: #{tpu_custom_call.1} parent=470 // loop_header_branch
        %758 = sbr.rel (%p756) target = $region478
      $region475: #{tpu_custom_call.1} parent=470 // loop_body
        %v762 = vld [vmem:[%s760] sm:%s753]
        %763 = vst [vmem:[%s761] sm:%s753] %v762
      $region476: #{tpu_custom_call.1} parent=470 // loop_footer
        %s759 = sadd.s32 1, %s755
      $region477: #{tpu_custom_call.1} parent=470 // loop_footer_branch
        %754 = sbr.rel target = $region473
      $region478: #{tpu_custom_call.1} parent=470 // loop_exit
        _
    $region471: #{tpu_custom_call.1} parent=1 // pred_fallthru
      _
    // Predicated region
    $region490: #{tpu_custom_call.1} parent=1 // pred_check
      _
    $region491: #{tpu_custom_call.1} parent=1 // pred_check_branch
      %787 = sbr.rel (0) target = $region493
    $region492: #{tpu_custom_call.1} parent=1 // pred_region
      %788 = vsyncadd %s744, 16
    $region493: #{tpu_custom_call.1} parent=1 // pred_fallthru
      _
    %s789 = smul.u32 1, 1
    %s790 = sshll.u32 %s789, 4
    %791 = dma.done [#allocation3], %s790
    %s792 = sshll.u32 %s789, 4
    %793 = dma.done %s72, %s792
    %s794 = sshll.u32 %s789, 4
    %795 = dma.done %s120, %s794
    %s796 = sshll.u32 %s789, 4
    %797 = dma.done %s168, %s796
    %s798 = sshll.u32 %s789, 4
    %799 = dma.done %s216, %s798
    %s800 = sshll.u32 %s789, 4
    %801 = dma.done %s264, %s800
    %s802 = sshll.u32 %s789, 4
    %803 = dma.done %s312, %s802
    %s804 = sshll.u32 %s789, 4
    %805 = dma.done %s360, %s804
    %s806 = sshll.u32 %s789, 4
    %807 = dma.done %s408, %s806
    %s808 = sshll.u32 %s789, 4
    %809 = dma.done %s456, %s808
    %s810 = sshll.u32 %s789, 4
    %811 = dma.done %s504, %s810
    %s812 = sshll.u32 %s789, 4
    %813 = dma.done %s552, %s812
    %s814 = sshll.u32 %s789, 4
    %815 = dma.done %s600, %s814
    %s816 = sshll.u32 %s789, 4
    %817 = dma.done %s648, %s816
    %s818 = sshll.u32 %s789, 4
    %819 = dma.done %s696, %s818
    %s820 = sshll.u32 %s789, 4
    %821 = dma.done %s744, %s820
    %v822 = vld [vmem:[#allocation2] sm:$0xff]
    %v823 = vld [vmem:[#allocation2 + $0x8] sm:$0xff]
    %v825 = vrot.slane %v822, 2
    %v827 = vadd.f32 %v822, %v825
    %v828 = vrot.slane %v822, 4
    %v830 = vadd.f32 %v827, %v828
    %v831 = vrot.slane %v822, 6
    %v833 = vadd.f32 %v830, %v831
    %v834 = vadd.f32 %v833, %v823
    %v836 = vrot.slane %v823, 2
    %v838 = vadd.f32 %v834, %v836
    %v839 = vrot.slane %v823, 4
    %v841 = vadd.f32 %v838, %v839
    %v842 = vrot.slane %v823, 6
    %v844 = vadd.f32 %v841, %v842
    %v847 = vunpack.c.l.s4 1966171168
    %v848 = vunpack.c.0.s8 %v847
    %v849 = vlaneseq
    %v850 = vshrl.u32 %v849, 7
    %v851 = vsub.s32 %v848, %v850
    %v852 = vrot.slane %v844, %v851
    %v853 = vcombine.high %v852, %v852
    %v855 = vunpack.c.l.s4 1966171168
    %v856 = vunpack.c.0.s8 %v855
    %v857 = vlaneseq
    %v858 = vshrl.u32 %v857, 7
    %v859 = vsub.s32 %v856, %v858
    %v860 = vrot.slane %v852, %v859
    %v862 = vunpack.c.l.s4 1966171168
    %v863 = vunpack.c.0.s8 %v862
    %v864 = vlaneseq
    %v865 = vshrl.u32 %v864, 7
    %v866 = vsub.s32 %v863, %v865
    %v867 = vrot.slane %v853, %v866
    %v868 = vld [vmem:[%s2] sm:$0xff]
    %v869 = vld [vmem:[%s2 + $0x8] sm:$0xff]
    %v870 = vlaneseq
    %v871 = vshrl.u32 %v870, 7
    %v872 = vsub.s32 0, %v871
    %v873 = vrot.slane %v860, %v872
    %v874 = vlaneseq
    %v875 = vshrl.u32 %v874, 7
    %v876 = vsub.s32 0, %v875
    %v877 = vrot.slane %v867, %v876
    %v880 = vmul.f32 %v873, %v868
    %v881 = vmul.f32 %v873, %v869
    %v882 = vmul.f32 %v877, %v868
    %v883 = vmul.f32 %v877, %v869
    %vm884 = vcmask 261120
    %v885 = vsel %vm884, %v880, 0.0
    %886 = vadd.xlane.f32.xlu0 %v885
    %v887 = vpop.xlane.xlu0 %886
    %v888 = vsel %vm884, %v881, 0.0
    %889 = vadd.xlane.f32.xlu0 %v888
    %v890 = vpop.xlane.xlu0 %889
    %v891 = vsel %vm884, %v882, 0.0
    %892 = vadd.xlane.f32.xlu0 %v891
    %v893 = vpop.xlane.xlu0 %892
    %v894 = vsel %vm884, %v883, 0.0
    %895 = vadd.xlane.f32.xlu0 %v894
    %v896 = vpop.xlane.xlu0 %895
    %v897 = vld [vmem:[%s3] sm:$0x1]
    %v898 = vmul.f32 %v897, 8.0
    %v900 = vlaneseq
    %v901 = vshrl.u32 %v900, 7
    %v902 = vsub.s32 0, %v901
    %v903 = vrot.slane %v898, %v902
    %905 = vbcast.lane.b32.xlu0 %v903, 256
    %v906 = vpop.permute.xlu0 %905
    %s908 = sor.u32 256, 8
    %909 = vbcast.lane.b32.xlu0 %v903, %s908
    %v910 = vpop.permute.xlu0 %909
    %v913 = vadd.f32 %v887, %v906
    %v914 = vadd.f32 %v890, %v910
    %v915 = vadd.f32 %v893, %v906
    %v916 = vadd.f32 %v896, %v910
    %921 = vset.pattern.permute.xlu0 0
    %922 = vperm.xlu0 %921, %v913
    %v923 = vpop.permute.xlu0 %922
    %924 = vset.pattern.permute.xlu0 0
    %925 = vperm.xlu0 %924, %v914
    %v926 = vpop.permute.xlu0 %925
    %927 = vset.pattern.permute.xlu0 0
    %928 = vperm.xlu0 %927, %v915
    %v929 = vpop.permute.xlu0 %928
    %930 = vset.pattern.permute.xlu0 0
    %931 = vperm.xlu0 %930, %v916
    %v932 = vpop.permute.xlu0 %931
    %v933 = vlaneseq
    %v934 = vand.u32 %v933, 127
    %v935 = vlaneseq
    %v936 = vshrl.u32 %v935, 7
    %v937 = vsub.s32 %v934, %v936
    %v938 = vrot.slane %v923, %v937
    %v939 = vadd.s32 %v934, 4294967288
    %v940 = vlaneseq
    %v941 = vshrl.u32 %v940, 7
    %v942 = vsub.s32 %v939, %v941
    %v943 = vrot.slane %v926, %v942
    %vm944 = vcmask 130112
    %v945 = vsel %vm944, %v943, %v938
    %v946 = vlaneseq
    %v947 = vshrl.u32 %v946, 7
    %v948 = vsub.s32 %v934, %v947
    %v949 = vrot.slane %v929, %v948
    %v950 = vlaneseq
    %v951 = vshrl.u32 %v950, 7
    %v952 = vsub.s32 %v939, %v951
    %v953 = vrot.slane %v932, %v952
    %v954 = vsel %vm944, %v953, %v949
    %vm955 = vcmask 1041409
    %v956 = vsel %vm955, %v954, %v945
    %vm958 = vcmask 123904
    %v959 = vsel %vm958, %v956, -inf
    %960 = vmax.xlane.f32.xlu0 %v959
    %v961 = vpop.xlane.xlu0 %960
    %v963 = vlaneseq
    %v964 = vshrl.u32 %v963, 7
    %v965 = vsub.s32 0, %v964
    %v966 = vrot.slane %v961, %v965
    %v967 = vlaneseq
    %v968 = vshrl.u32 %v967, 7
    %v969 = vsub.s32 1, %v968
    %v970 = vrot.slane %v961, %v969
    %v973 = vsub.f32 %v913, %v966
    %v974 = vsub.f32 %v914, %v966
    %v975 = vsub.f32 %v915, %v970
    %v976 = vsub.f32 %v916, %v970
    %v977 = vmul.f32 %v973, 1.442695
    %v978 = vpow.pop %v977
    %v979 = vmul.f32 %v974, 1.442695
    %v980 = vpow.pop %v979
    %v981 = vmul.f32 %v975, 1.442695
    %v982 = vpow.pop %v981
    %v983 = vmul.f32 %v976, 1.442695
    %v984 = vpow.pop %v983
    %989 = vset.pattern.permute.xlu0 0
    %990 = vperm.xlu0 %989, %v978
    %v991 = vpop.permute.xlu0 %990
    %992 = vset.pattern.permute.xlu0 0
    %993 = vperm.xlu0 %992, %v980
    %v994 = vpop.permute.xlu0 %993
    %995 = vset.pattern.permute.xlu0 0
    %996 = vperm.xlu0 %995, %v982
    %v997 = vpop.permute.xlu0 %996
    %998 = vset.pattern.permute.xlu0 0
    %999 = vperm.xlu0 %998, %v984
    %v1000 = vpop.permute.xlu0 %999
    %v1001 = vlaneseq
    %v1002 = vshrl.u32 %v1001, 7
    %v1003 = vsub.s32 %v934, %v1002
    %v1004 = vrot.slane %v991, %v1003
    %v1005 = vlaneseq
    %v1006 = vshrl.u32 %v1005, 7
    %v1007 = vsub.s32 %v939, %v1006
    %v1008 = vrot.slane %v994, %v1007
    %v1009 = vsel %vm944, %v1008, %v1004
    %v1010 = vlaneseq
    %v1011 = vshrl.u32 %v1010, 7
    %v1012 = vsub.s32 %v934, %v1011
    %v1013 = vrot.slane %v997, %v1012
    %v1014 = vlaneseq
    %v1015 = vshrl.u32 %v1014, 7
    %v1016 = vsub.s32 %v939, %v1015
    %v1017 = vrot.slane %v1000, %v1016
    %v1018 = vsel %vm944, %v1017, %v1013
    %v1019 = vsel %vm955, %v1018, %v1009
    %v1021 = vsel %vm958, %v1019, 0.0
    %1022 = vadd.xlane.f32.xlu0 %v1021
    %v1023 = vpop.xlane.xlu0 %1022
    %v1024 = vrcp.pop %v1023
    %v1026 = vlaneseq
    %v1027 = vshrl.u32 %v1026, 7
    %v1028 = vsub.s32 0, %v1027
    %v1029 = vrot.slane %v1024, %v1028
    %v1030 = vlaneseq
    %v1031 = vshrl.u32 %v1030, 7
    %v1032 = vsub.s32 1, %v1031
    %v1033 = vrot.slane %v1024, %v1032
    %v1036 = vmul.f32 %v978, %v1029
    %v1037 = vmul.f32 %v980, %v1029
    %v1038 = vmul.f32 %v982, %v1033
    %v1039 = vmul.f32 %v984, %v1033
    %v1040 = vld [vmem:[%s4] sm:$0xff]
    %v1041 = vld [vmem:[%s4 + $0x8] sm:$0xff]
    %v1042 = vld [vmem:[%s4 + $0x10] sm:$0xff]
    %v1043 = vld [vmem:[%s4 + $0x18] sm:$0xff]
    %1048 = vset.pattern.permute.xlu0 0
    %1049 = vperm.xlu0 %1048, %v1036
    %v1050 = vpop.permute.xlu0 %1049
    %1051 = vset.pattern.permute.xlu0 0
    %1052 = vperm.xlu0 %1051, %v1037
    %v1053 = vpop.permute.xlu0 %1052
    %1054 = vset.pattern.permute.xlu0 0
    %1055 = vperm.xlu0 %1054, %v1038
    %v1056 = vpop.permute.xlu0 %1055
    %1057 = vset.pattern.permute.xlu0 0
    %1058 = vperm.xlu0 %1057, %v1039
    %v1059 = vpop.permute.xlu0 %1058
    %v1060 = vlaneseq
    %v1061 = vshrl.u32 %v1060, 7
    %v1062 = vsub.s32 %v934, %v1061
    %v1063 = vrot.slane %v1050, %v1062
    %v1064 = vlaneseq
    %v1065 = vshrl.u32 %v1064, 7
    %v1066 = vsub.s32 %v939, %v1065
    %v1067 = vrot.slane %v1053, %v1066
    %v1068 = vsel %vm944, %v1067, %v1063
    %v1069 = vlaneseq
    %v1070 = vshrl.u32 %v1069, 7
    %v1071 = vsub.s32 %v934, %v1070
    %v1072 = vrot.slane %v1056, %v1071
    %v1073 = vlaneseq
    %v1074 = vshrl.u32 %v1073, 7
    %v1075 = vsub.s32 %v939, %v1074
    %v1076 = vrot.slane %v1059, %v1075
    %v1077 = vsel %vm944, %v1076, %v1072
    %vm1078 = vcmask 1042434
    %v1079 = vsel %vm1078, %v1068, %v1068
    %vm1080 = vcmask 1043459
    %v1081 = vsel %vm1080, %v1068, %v1079
    %vm1082 = vcmask 1044484
    %v1083 = vsel %vm1082, %v1068, %v1081
    %vm1084 = vcmask 1045509
    %v1085 = vsel %vm1084, %v1068, %v1083
    %vm1086 = vcmask 1046534
    %v1087 = vsel %vm1086, %v1068, %v1085
    %vm1088 = vcmask 1047559
    %v1089 = vsel %vm1088, %v1068, %v1087
    %v1090 = vsel %vm1078, %v1077, %v1077
    %v1091 = vsel %vm1080, %v1077, %v1090
    %v1092 = vsel %vm1082, %v1077, %v1091
    %v1093 = vsel %vm1084, %v1077, %v1092
    %v1094 = vsel %vm1086, %v1077, %v1093
    %v1095 = vsel %vm1088, %v1077, %v1094
    %v1098 = vmul.f32 %v1040, %v1089
    %v1099 = vmul.f32 %v1041, %v1089
    %v1100 = vmul.f32 %v1042, %v1089
    %v1101 = vmul.f32 %v1043, %v1089
    %v1102 = vmul.f32 %v1040, %v1095
    %v1103 = vmul.f32 %v1041, %v1095
    %v1104 = vmul.f32 %v1042, %v1095
    %v1105 = vmul.f32 %v1043, %v1095
    %vm1106 = vcmask 130048
    %v1107 = vsel %vm1106, %v1098, 0.0
    %1108 = vadd.xlane.f32.xlu0 %v1107
    %v1109 = vpop.xlane.xlu0 %1108
    %v1110 = vsel %vm1106, %v1099, 0.0
    %1111 = vadd.xlane.f32.xlu0 %v1110
    %v1112 = vpop.xlane.xlu0 %1111
    %v1113 = vsel %vm1106, %v1100, 0.0
    %1114 = vadd.xlane.f32.xlu0 %v1113
    %v1115 = vpop.xlane.xlu0 %1114
    %v1116 = vsel %vm1106, %v1101, 0.0
    %1117 = vadd.xlane.f32.xlu0 %v1116
    %v1118 = vpop.xlane.xlu0 %1117
    %v1119 = vsel %vm1106, %v1102, 0.0
    %1120 = vadd.xlane.f32.xlu0 %v1119
    %v1121 = vpop.xlane.xlu0 %1120
    %v1122 = vsel %vm1106, %v1103, 0.0
    %1123 = vadd.xlane.f32.xlu0 %v1122
    %v1124 = vpop.xlane.xlu0 %1123
    %v1125 = vsel %vm1106, %v1104, 0.0
    %1126 = vadd.xlane.f32.xlu0 %v1125
    %v1127 = vpop.xlane.xlu0 %1126
    %v1128 = vsel %vm1106, %v1105, 0.0
    %1129 = vadd.xlane.f32.xlu0 %v1128
    %v1130 = vpop.xlane.xlu0 %1129
    %v1131 = vmul.f32 %v844, 0.125
    %v1140 = vlaneseq
    %v1141 = vshrl.u32 %v1140, 7
    %v1142 = vsub.s32 %v934, %v1141
    %v1143 = vrot.slane %v1109, %v1142
    %v1144 = vlaneseq
    %v1145 = vshrl.u32 %v1144, 7
    %v1146 = vsub.s32 %v939, %v1145
    %v1147 = vrot.slane %v1112, %v1146
    %v1148 = vsel %vm944, %v1147, %v1143
    %v1149 = vadd.s32 %v934, 4294967280
    %v1150 = vlaneseq
    %v1151 = vshrl.u32 %v1150, 7
    %v1152 = vsub.s32 %v1149, %v1151
    %v1153 = vrot.slane %v1115, %v1152
    %vm1154 = vcmask 195712
    %v1155 = vsel %vm1154, %v1153, %v1148
    %v1156 = vadd.s32 %v934, 4294967272
    %v1157 = vlaneseq
    %v1158 = vshrl.u32 %v1157, 7
    %v1159 = vsub.s32 %v1156, %v1158
    %v1160 = vrot.slane %v1118, %v1159
    %vm1161 = vcmask 261312
    %v1162 = vsel %vm1161, %v1160, %v1155
    %v1163 = vlaneseq
    %v1164 = vshrl.u32 %v1163, 7
    %v1165 = vsub.s32 %v934, %v1164
    %v1166 = vrot.slane %v1121, %v1165
    %v1167 = vlaneseq
    %v1168 = vshrl.u32 %v1167, 7
    %v1169 = vsub.s32 %v939, %v1168
    %v1170 = vrot.slane %v1124, %v1169
    %v1171 = vsel %vm944, %v1170, %v1166
    %v1172 = vlaneseq
    %v1173 = vshrl.u32 %v1172, 7
    %v1174 = vsub.s32 %v1149, %v1173
    %v1175 = vrot.slane %v1127, %v1174
    %v1176 = vsel %vm1154, %v1175, %v1171
    %v1177 = vlaneseq
    %v1178 = vshrl.u32 %v1177, 7
    %v1179 = vsub.s32 %v1156, %v1178
    %v1180 = vrot.slane %v1130, %v1179
    %v1181 = vsel %vm1161, %v1180, %v1176
    %v1182 = vsel %vm955, %v1181, %v1162
    %v1184 = vadd.f32 %v1131, %v1182
    %v1185 = vsel %vm1080, %v1181, %v1162
    %v1187 = vsel %vm1084, %v1181, %v1162
    %v1189 = vsel %vm1088, %v1181, %v1162
    %vm1191 = vcmask 1041408
    %v1192 = vsel %vm1191, %v1182, %v1185
    %vm1193 = vcmask 1043456
    %v1194 = vsel %vm1193, %v1192, %v1187
    %vm1195 = vcmask 1045504
    %v1196 = vsel %vm1195, %v1194, %v1189
    %v1197 = vadd.f32 %v822, %v1196
    %v1198 = vadd.f32 %v823, %v1196
    %v1199 = vsel %vm1191, %v1184, %v1185
    %1200 = vst.msk [vmem:[#allocation6] sm:$0xff] %vm884, %v1197
    %1201 = vst.msk [vmem:[#allocation6 + $0x8] sm:$0xff] %vm884, %v1198
    %vm1202 = vcmask 257024
    %1203 = vst.msk [vmem:[#allocation6 + $0x10] sm:$0xf] %vm1202, %v1199
    // Predicated region
    $region494: #{tpu_custom_call.1} parent=1 // pred_check
      _
    $region495: #{tpu_custom_call.1} parent=1 // pred_check_branch
      %1205 = sbr.rel (0) target = $region497
    $region496: #{tpu_custom_call.1} parent=1 // pred_region
      %s1207 = ssub.s32 384, 384
      %1208 = vsyncadd [#allocation7], %s1207
      %s1209 = sshll.u32 [#allocation6], 4
      %s1210 = int_to_ptr.vmem [resolvable:$true] %s1209
      %1215 = dma.vmem_to_hbm [thread:$0]  %s1210, 384, %s5, [#allocation7], 128, 128, 8
    $region497: #{tpu_custom_call.1} parent=1 // pred_fallthru
      _
    // Predicated region
    $region498: #{tpu_custom_call.1} parent=1 // pred_check
      _
    $region499: #{tpu_custom_call.1} parent=1 // pred_check_branch
      %1217 = sbr.rel (0) target = $region501
    $region500: #{tpu_custom_call.1} parent=1 // pred_region
      %1218 = dma.done [#allocation7], 384
    $region501: #{tpu_custom_call.1} parent=1 // pred_fallthru
      _
    %1219 = vsyncpa [#allocation7], 1
  %1220 = vsyncmov [#allocation3]
  %s1221 = vpop.sfrf %1220
  %p1222 = scmp.eq.s32.totalorder %s1221, 0
  %p1223 = pneg %p1222
  %1225 = shalt.err (%p1223)
  %s1226 = scalar_lea.sflag [#allocation3], 1
  %1227 = vsyncmov %s1226
  %s1228 = vpop.sfrf %1227
  %p1229 = scmp.eq.s32.totalorder %s1228, 0
  %p1230 = pneg %p1229
  %1232 = shalt.err (%p1230)
  %s1233 = scalar_lea.sflag [#allocation3], 2
  %1234 = vsyncmov %s1233
  %s1235 = vpop.sfrf %1234
  %p1236 = scmp.eq.s32.totalorder %s1235, 0
  %p1237 = pneg %p1236
  %1239 = shalt.err (%p1237)
  %s1240 = scalar_lea.sflag [#allocation3], 3
  %1241 = vsyncmov %s1240
  %s1242 = vpop.sfrf %1241
  %p1243 = scmp.eq.s32.totalorder %s1242, 0
  %p1244 = pneg %p1243
  %1246 = shalt.err (%p1244)
  %s1247 = scalar_lea.sflag [#allocation3], 4
  %1248 = vsyncmov %s1247
  %s1249 = vpop.sfrf %1248
  %p1250 = scmp.eq.s32.totalorder %s1249, 0
  %p1251 = pneg %p1250
  %1253 = shalt.err (%p1251)
  %s1254 = scalar_lea.sflag [#allocation3], 5
  %1255 = vsyncmov %s1254
  %s1256 = vpop.sfrf %1255
  %p1257 = scmp.eq.s32.totalorder %s1256, 0
  %p1258 = pneg %p1257
  %1260 = shalt.err (%p1258)
  %s1261 = scalar_lea.sflag [#allocation3], 6
  %1262 = vsyncmov %s1261
  %s1263 = vpop.sfrf %1262
  %p1264 = scmp.eq.s32.totalorder %s1263, 0
  %p1265 = pneg %p1264
  %1267 = shalt.err (%p1265)
  %s1268 = scalar_lea.sflag [#allocation3], 7
  %1269 = vsyncmov %s1268
  %s1270 = vpop.sfrf %1269
  %p1271 = scmp.eq.s32.totalorder %s1270, 0
  %p1272 = pneg %p1271
  %1274 = shalt.err (%p1272)
  %s1275 = scalar_lea.sflag [#allocation3], 8
  %1276 = vsyncmov %s1275
  %s1277 = vpop.sfrf %1276
  %p1278 = scmp.eq.s32.totalorder %s1277, 0
  %p1279 = pneg %p1278
  %1281 = shalt.err (%p1279)
  %s1282 = scalar_lea.sflag [#allocation3], 9
  %1283 = vsyncmov %s1282
  %s1284 = vpop.sfrf %1283
  %p1285 = scmp.eq.s32.totalorder %s1284, 0
  %p1286 = pneg %p1285
  %1288 = shalt.err (%p1286)
  %s1289 = scalar_lea.sflag [#allocation3], 10
  %1290 = vsyncmov %s1289
  %s1291 = vpop.sfrf %1290
  %p1292 = scmp.eq.s32.totalorder %s1291, 0
  %p1293 = pneg %p1292
  %1295 = shalt.err (%p1293)
  %s1296 = scalar_lea.sflag [#allocation3], 11
  %1297 = vsyncmov %s1296
  %s1298 = vpop.sfrf %1297
  %p1299 = scmp.eq.s32.totalorder %s1298, 0
  %p1300 = pneg %p1299
  %1302 = shalt.err (%p1300)
  %s1303 = scalar_lea.sflag [#allocation3], 12
  %1304 = vsyncmov %s1303
  %s1305 = vpop.sfrf %1304
  %p1306 = scmp.eq.s32.totalorder %s1305, 0
  %p1307 = pneg %p1306
  %1309 = shalt.err (%p1307)
  %s1310 = scalar_lea.sflag [#allocation3], 13
  %1311 = vsyncmov %s1310
  %s1312 = vpop.sfrf %1311
  %p1313 = scmp.eq.s32.totalorder %s1312, 0
  %p1314 = pneg %p1313
  %1316 = shalt.err (%p1314)
  %s1317 = scalar_lea.sflag [#allocation3], 14
  %1318 = vsyncmov %s1317
  %s1319 = vpop.sfrf %1318
  %p1320 = scmp.eq.s32.totalorder %s1319, 0
  %p1321 = pneg %p1320
  %1323 = shalt.err (%p1321)
  %s1324 = scalar_lea.sflag [#allocation3], 15
  %1325 = vsyncmov %s1324
  %s1326 = vpop.sfrf %1325
  %p1327 = scmp.eq.s32.totalorder %s1326, 0
  %p1328 = pneg %p1327
  %1330 = shalt.err (%p1328)

</llo_original>
